<compile_context>
chip_gen: v7x
topology: tpu7x:2x2x1
jax: 0.10.0
libtpu: 0.0.40
codegen_flags: <defaults>
</compile_context>

<pallas_src>
import functools
import math

import jax
import jax.numpy as jnp
from jax.experimental import pallas as pl
from jax.experimental.pallas import tpu as pltpu


def _layernorm(x, gamma, beta, eps=1e-5):
    mean = jnp.mean(x, axis=-1, keepdims=True)
    var = jnp.mean((x - mean) ** 2, axis=-1, keepdims=True)  # biased, like torch
    return (x - mean) * jax.lax.rsqrt(var + eps) * gamma + beta


def encoder_block_kernel(
    x_ref,                      # (1, S, E) activations
    wqkv_ref, bqkv_ref,         # per-head fused q|k|v: (1, E, 3*Dh), (1, 1, 3*Dh)
    wo_ref, bo_ref,             # per-head out-proj rows (1, Dh, E); full bias (1, E)
    g1_ref, be1_ref,            # LayerNorm 1
    w1_ref, b1_ref, w2_ref, b2_ref,   # FFN
    g2_ref, be2_ref,            # LayerNorm 2
    o_ref,                      # (1, S, E) output
    acc_ref,                    # (S, E) f32 attention-output accumulator (VMEM scratch)
    *, approx_recip,
):
    h = pl.program_id(1)                      # head index (reduction axis)
    cdt = wqkv_ref.dtype                      # matmul compute dtype (bf16 or f32)
    x = x_ref[0]                              # (S, E)
    xc = x.astype(cdt)
    dh = wo_ref.shape[1]
    scale = 1.0 / math.sqrt(dh)

    @pl.when(h == 0)
    def _init():
        acc_ref[...] = jnp.zeros_like(acc_ref)

    # ---- fused q|k|v projection for this head: one MXU push, N = 3*Dh ----
    qkv = jnp.dot(xc, wqkv_ref[0], preferred_element_type=jnp.float32) + bqkv_ref[0]
    q = qkv[:, :dh] * scale                   # fold 1/sqrt(Dh) into q
    k = qkv[:, dh:2 * dh]
    v = qkv[:, 2 * dh:]

    # ---- scores: contract last dims of q and k (no materialized transpose) ----
    s = jax.lax.dot_general(
        q.astype(cdt), k.astype(cdt),
        (((1,), (1,)), ((), ())),
        preferred_element_type=jnp.float32)   # (S, S), f32
    s = s - jnp.max(s, axis=-1, keepdims=True)
    p = jnp.exp(s)
    p = p * pl.reciprocal(jnp.sum(p, axis=-1, keepdims=True), approx=approx_recip)

    pv = jnp.dot(p.astype(cdt), v.astype(cdt),
                 preferred_element_type=jnp.float32)           # (S, Dh)
    # out-projection restricted to this head's rows; summing over heads is
    # mathematically identical to concat-then-project.
    acc_ref[...] += jnp.dot(pv.astype(cdt), wo_ref[0],
                            preferred_element_type=jnp.float32)

    # ---- last head: residual + LN1, FFN, residual + LN2, store ----
    @pl.when(h == pl.num_programs(1) - 1)
    def _finalize():
        xf = x.astype(jnp.float32)
        attn = acc_ref[...] + bo_ref[...]
        h1 = _layernorm(xf + attn, g1_ref[...], be1_ref[...])  # dropout == identity (eval)
        f = jnp.dot(h1.astype(cdt), w1_ref[...],
                    preferred_element_type=jnp.float32) + b1_ref[...]
        f = jnp.maximum(f, 0.0)
        f = jnp.dot(f.astype(cdt), w2_ref[...],
                    preferred_element_type=jnp.float32) + b2_ref[...]
        out = _layernorm(h1 + f, g2_ref[...], be2_ref[...])
        o_ref[0] = out.astype(o_ref.dtype)


def transformer_encoder_block(x, params, n_heads, *, compute_dtype=jnp.bfloat16):
    B, S, E = x.shape
    F = params["w1"].shape[1]
    H = n_heads
    assert E % H == 0
    Dh = E // H

    # ---- host-side layout plumbing (free): pack per-head fused weights ----
    def per_head_w(w):          # (E, E) -> (H, E, Dh)
        return w.reshape(E, H, Dh).transpose(1, 0, 2)

    def per_head_b(b):          # (1, E) -> (H, 1, Dh)
        return b.reshape(1, H, Dh).transpose(1, 0, 2)

    wqkv = jnp.concatenate(
        [per_head_w(params["wq"]), per_head_w(params["wk"]), per_head_w(params["wv"])],
        axis=-1).astype(compute_dtype)                        # (H, E, 3*Dh)
    bqkv = jnp.concatenate(
        [per_head_b(params["bq"]), per_head_b(params["bk"]), per_head_b(params["bv"])],
        axis=-1).astype(jnp.float32)                          # (H, 1, 3*Dh)
    wo = params["wo"].reshape(H, Dh, E).astype(compute_dtype) # (H, Dh, E)
    w1 = params["w1"].astype(compute_dtype)
    w2 = params["w2"].astype(compute_dtype)

    def const_spec(shape):
        return pl.BlockSpec(shape, lambda b, h: tuple(0 for _ in shape))

    in_specs = [
        pl.BlockSpec((1, S, E), lambda b, h: (b, 0, 0)),       # x (resident across h)
        pl.BlockSpec((1, E, 3 * Dh), lambda b, h: (h, 0, 0)),  # fused qkv weight (per head)
        pl.BlockSpec((1, 1, 3 * Dh), lambda b, h: (h, 0, 0)),  # fused qkv bias (per head)
        pl.BlockSpec((1, Dh, E), lambda b, h: (h, 0, 0)),      # out-proj rows (per head)
        const_spec((1, E)),                                    # bo
        const_spec((1, E)), const_spec((1, E)),                # ln1 gamma, beta
        const_spec((E, F)), const_spec((1, F)),                # ffn w1, b1
        const_spec((F, E)), const_spec((1, E)),                # ffn w2, b2
        const_spec((1, E)), const_spec((1, E)),                # ln2 gamma, beta
    ]

    # Advisory cost hint: 5 matmul groups + softmax exps + weight/activation bytes.
    flops = 2 * B * S * E * (4 * E + 2 * F + 2 * S)
    transcendentals = B * H * S * S
    w_bytes = (4 * E * E + 2 * E * F) * jnp.dtype(compute_dtype).itemsize
    bytes_accessed = int(2 * B * S * E * 4 + w_bytes + (8 * E + F) * 4)
    cost = pl.CostEstimate(flops=int(flops), transcendentals=int(transcendentals),
                           bytes_accessed=bytes_accessed)

    # Raise the scoped-VMEM budget explicitly (default 16/32 MiB is too small at
    # production E/F); keep headroom relative to the chip's physical VMEM.
    try:
        vmem_cap = int(pltpu.get_tpu_info().vmem_capacity_bytes)
    except Exception:
        vmem_cap = 64 * 1024 * 1024
    vmem_limit = int(min(100 * 1024 * 1024, (vmem_cap * 3) // 4))

    kernel = functools.partial(
        encoder_block_kernel,
        approx_recip=(jnp.dtype(compute_dtype) != jnp.dtype(jnp.float32)))

    return pl.pallas_call(
        kernel,
        out_shape=jax.ShapeDtypeStruct((B, S, E), x.dtype),
        grid_spec=pltpu.PrefetchScalarGridSpec(
            num_scalar_prefetch=0,
            grid=(B, H),                       # heads = reduction axis (accumulated)
            in_specs=in_specs,
            out_specs=pl.BlockSpec((1, S, E), lambda b, h: (b, 0, 0)),
            scratch_shapes=[pltpu.VMEM((S, E), jnp.float32)],
        ),
        compiler_params=pltpu.CompilerParams(
            dimension_semantics=("parallel", "arbitrary"),
            vmem_limit_bytes=vmem_limit,
        ),
        cost_estimate=cost,
    )(
        x,
        wqkv, bqkv, wo, params["bo"],
        params["g1"], params["be1"],
        w1, params["b1"], w2, params["b2"],
        params["g2"], params["be2"],
    )


def reference_forward(x, params, n_heads):
    """Pure-JAX reference mirroring the PyTorch module (eval mode)."""
    B, S, E = x.shape
    Dh = E // n_heads
    scale = 1.0 / (Dh ** 0.5)

    q = x @ params["wq"] + params["bq"]
    k = x @ params["wk"] + params["bk"]
    v = x @ params["wv"] + params["bv"]

    def split(t):  # (B,S,E) -> (B,H,S,Dh)
        return t.reshape(B, S, n_heads, Dh).transpose(0, 2, 1, 3)

    qh, kh, vh = split(q), split(k), split(v)
    s = jnp.einsum("bhqd,bhkd->bhqk", qh, kh) * scale
    p = jax.nn.softmax(s, axis=-1)
    attn = jnp.einsum("bhqk,bhkd->bhqd", p, vh)
    attn = attn.transpose(0, 2, 1, 3).reshape(B, S, E)
    attn = attn @ params["wo"] + params["bo"]

    h1 = _layernorm(x + attn, params["g1"], params["be1"])
    f = jnp.maximum(h1 @ params["w1"] + params["b1"], 0.0)
    f = f @ params["w2"] + params["b2"]
    return _layernorm(h1 + f, params["g2"], params["be2"])


def init_params(key, E, F):
    ks = jax.random.split(key, 16)
    sc_e = 1.0 / (E ** 0.5)
    sc_f = 1.0 / (F ** 0.5)

    def nrm(k, shape, s):
        return jax.random.normal(k, shape, jnp.float32) * s

    return {
        "wq": nrm(ks[0], (E, E), sc_e), "bq": nrm(ks[1], (1, E), 0.05),
        "wk": nrm(ks[2], (E, E), sc_e), "bk": nrm(ks[3], (1, E), 0.05),
        "wv": nrm(ks[4], (E, E), sc_e), "bv": nrm(ks[5], (1, E), 0.05),
        "wo": nrm(ks[6], (E, E), sc_e), "bo": nrm(ks[7], (1, E), 0.05),
        "g1": 1.0 + nrm(ks[8], (1, E), 0.05), "be1": nrm(ks[9], (1, E), 0.05),
        "w1": nrm(ks[10], (E, F), sc_e), "b1": nrm(ks[11], (1, F), 0.05),
        "w2": nrm(ks[12], (F, E), sc_f), "b2": nrm(ks[13], (1, E), 0.05),
        "g2": 1.0 + nrm(ks[14], (1, E), 0.05), "be2": nrm(ks[15], (1, E), 0.05),
    }


if __name__ == "__main__":
    B, S, E, H, FF = 2, 8, 32, 4, 64

    key = jax.random.PRNGKey(0)
    kx, kp = jax.random.split(key)
    x = jax.random.normal(kx, (B, S, E), jnp.float32)
    params = init_params(kp, E, FF)

    ref = reference_forward(x, params, n_heads=H)

    # Exact-precision path (f32 matmul operands, exact reciprocal): tight check.
    out_f32 = jax.block_until_ready(
        transformer_encoder_block(x, params, n_heads=H, compute_dtype=jnp.float32))
    assert out_f32.shape == (B, S, E)
    err_f32 = float(jnp.max(jnp.abs(out_f32 - ref)))
    assert jnp.allclose(out_f32, ref, atol=1e-3, rtol=1e-3), err_f32

    # Fast path (bf16 matmul operands, f32 accumulate / softmax / LayerNorm).
    out_bf16 = jax.block_until_ready(
        transformer_encoder_block(x, params, n_heads=H, compute_dtype=jnp.bfloat16))
    err_bf16 = float(jnp.max(jnp.abs(out_bf16 - ref)))
    assert jnp.allclose(out_bf16, ref, atol=1e-1, rtol=1e-1), err_bf16

    print("KERNEL_OK")
</pallas_src>

<mosaic_0001>
module attributes {stable_mosaic.version = 11 : i64} {
  func.func @encoder_block_kernel(%arg0: i32, %arg1: i32, %arg2: memref<1x8x32xf32, #tpu.memory_space<vmem>>, %arg3: memref<1x32x24xf32, #tpu.memory_space<vmem>>, %arg4: memref<1x1x24xf32, #tpu.memory_space<vmem>>, %arg5: memref<1x8x32xf32, #tpu.memory_space<vmem>>, %arg6: memref<1x32xf32, #tpu.memory_space<vmem>>, %arg7: memref<1x32xf32, #tpu.memory_space<vmem>>, %arg8: memref<1x32xf32, #tpu.memory_space<vmem>>, %arg9: memref<32x64xf32, #tpu.memory_space<vmem>>, %arg10: memref<1x64xf32, #tpu.memory_space<vmem>>, %arg11: memref<64x32xf32, #tpu.memory_space<vmem>>, %arg12: memref<1x32xf32, #tpu.memory_space<vmem>>, %arg13: memref<1x32xf32, #tpu.memory_space<vmem>>, %arg14: memref<1x32xf32, #tpu.memory_space<vmem>>, %arg15: memref<1x8x32xf32, #tpu.memory_space<vmem>>, %arg16: memref<8x32xf32, #tpu.memory_space<vmem>>) attributes {dimension_semantics = [#tpu.dimension_semantics<parallel>, #tpu.dimension_semantics<arbitrary>], iteration_bounds = array<i64: 2, 4>, scalar_prefetch = 0 : i64, scratch_operands = 1 : i64, tpu.core_type = #tpu.core_type<tc>, window_params = [{transform_indices = @transform_0, window_bounds = array<i64: 1, 8, 32>}, {transform_indices = @transform_1, window_bounds = array<i64: 1, 32, 24>}, {transform_indices = @transform_2, window_bounds = array<i64: 1, 1, 24>}, {transform_indices = @transform_3, window_bounds = array<i64: 1, 8, 32>}, {pipeline_mode = #tpu.pipeline_mode<synchronous>, transform_indices = @transform_4, window_bounds = array<i64: 1, 32>}, {pipeline_mode = #tpu.pipeline_mode<synchronous>, transform_indices = @transform_5, window_bounds = array<i64: 1, 32>}, {pipeline_mode = #tpu.pipeline_mode<synchronous>, transform_indices = @transform_6, window_bounds = array<i64: 1, 32>}, {pipeline_mode = #tpu.pipeline_mode<synchronous>, transform_indices = @transform_7, window_bounds = array<i64: 32, 64>}, {pipeline_mode = #tpu.pipeline_mode<synchronous>, transform_indices = @transform_8, window_bounds = array<i64: 1, 64>}, {pipeline_mode = #tpu.pipeline_mode<synchronous>, transform_indices = @transform_9, window_bounds = array<i64: 64, 32>}, {pipeline_mode = #tpu.pipeline_mode<synchronous>, transform_indices = @transform_10, window_bounds = array<i64: 1, 32>}, {pipeline_mode = #tpu.pipeline_mode<synchronous>, transform_indices = @transform_11, window_bounds = array<i64: 1, 32>}, {pipeline_mode = #tpu.pipeline_mode<synchronous>, transform_indices = @transform_12, window_bounds = array<i64: 1, 32>}, {transform_indices = @transform_13, window_bounds = array<i64: 1, 8, 32>}]} {
    %c0 = arith.constant 0 : index
    %c0_0 = arith.constant 0 : index
    %c0_1 = arith.constant 0 : index
    %0 = vector.load %arg2[%c0, %c0_0, %c0_1] : memref<1x8x32xf32, #tpu.memory_space<vmem>>, vector<1x8x32xf32>
    %1 = vector.shape_cast %0 : vector<1x8x32xf32> to vector<8x32xf32>
    %c0_i32 = arith.constant 0 : i32
    %2 = arith.cmpi eq, %arg1, %c0_i32 : i32
    %3 = arith.extui %2 : i1 to i32
    %c0_i32_2 = arith.constant 0 : i32
    %4 = arith.cmpi ne, %3, %c0_i32_2 : i32
    scf.if %4 {
      %cst_23 = arith.constant 0.000000e+00 : f32
      %38 = vector.broadcast %cst_23 : f32 to vector<8x32xf32>
      %c0_24 = arith.constant 0 : index
      %c0_25 = arith.constant 0 : index
      %39 = vector.load %arg16[%c0_24, %c0_25] : memref<8x32xf32, #tpu.memory_space<vmem>>, vector<8x32xf32>
      tpu.vector_store %arg16[%c0_24, %c0_25], %38 {strides = array<i32>} : memref<8x32xf32, #tpu.memory_space<vmem>>, vector<8x32xf32>,
    } else {
    }
    %c0_3 = arith.constant 0 : index
    %c0_4 = arith.constant 0 : index
    %c0_5 = arith.constant 0 : index
    %5 = vector.load %arg3[%c0_3, %c0_4, %c0_5] : memref<1x32x24xf32, #tpu.memory_space<vmem>>, vector<1x32x24xf32>
    %6 = vector.shape_cast %5 : vector<1x32x24xf32> to vector<32x24xf32>
    %cst = arith.constant dense<0.000000e+00> : vector<8x24xf32>
    %7 = tpu.matmul %1, %6, %cst {dimension_numbers = #tpu.dot_dimension_numbers<[1], [0], [0], [1], [0, 0, 1, 1], [], []>} : vector<8x32xf32>, vector<32x24xf32>, vector<8x24xf32> -> vector<8x24xf32>
    %c0_6 = arith.constant 0 : index
    %c0_7 = arith.constant 0 : index
    %c0_8 = arith.constant 0 : index
    %8 = vector.load %arg4[%c0_6, %c0_7, %c0_8] : memref<1x1x24xf32, #tpu.memory_space<vmem>>, vector<1x1x24xf32>
    %9 = vector.shape_cast %8 : vector<1x1x24xf32> to vector<1x24xf32>
    %10 = vector.broadcast %9 : vector<1x24xf32> to vector<8x24xf32>
    %11 = arith.addf %7, %10 : vector<8x24xf32>
    %12 = vector.extract_strided_slice %11 {offsets = [0, 0], sizes = [8, 8], strides = [1, 1]} : vector<8x24xf32> to vector<8x8xf32>
    %cst_9 = arith.constant 0.353553385 : f32
    %13 = vector.broadcast %cst_9 : f32 to vector<8x8xf32>
    %14 = arith.mulf %12, %13 : vector<8x8xf32>
    %15 = vector.extract_strided_slice %11 {offsets = [0, 8], sizes = [8, 8], strides = [1, 1]} : vector<8x24xf32> to vector<8x8xf32>
    %16 = vector.extract_strided_slice %11 {offsets = [0, 16], sizes = [8, 8], strides = [1, 1]} : vector<8x24xf32> to vector<8x8xf32>
    %cst_10 = arith.constant dense<0.000000e+00> : vector<8x8xf32>
    %17 = tpu.matmul %14, %15, %cst_10 {dimension_numbers = #tpu.dot_dimension_numbers<[1], [1], [0], [0], [0, 0, 1, 0], [], []>} : vector<8x8xf32>, vector<8x8xf32>, vector<8x8xf32> -> vector<8x8xf32>
    %cst_11 = arith.constant dense<0xFF800000> : vector<8xf32>
    %18 = vector.multi_reduction <maximumf>, %17, %cst_11 [1] : vector<8x8xf32> to vector<8xf32>
    %19 = vector.shape_cast %18 : vector<8xf32> to vector<8x1xf32>
    %20 = vector.broadcast %19 : vector<8x1xf32> to vector<8x8xf32>
    %21 = arith.subf %17, %20 : vector<8x8xf32>
    %22 = math.exp %21 : vector<8x8xf32>
    %cst_12 = arith.constant dense<0.000000e+00> : vector<8xf32>
    %23 = vector.multi_reduction <add>, %22, %cst_12 [1] : vector<8x8xf32> to vector<8xf32>
    %24 = vector.shape_cast %23 : vector<8xf32> to vector<8x1xf32>
    %25 = tpu.reciprocal %24 : vector<8x1xf32> -> vector<8x1xf32>
    %26 = vector.broadcast %25 : vector<8x1xf32> to vector<8x8xf32>
    %27 = arith.mulf %22, %26 : vector<8x8xf32>
    %cst_13 = arith.constant dense<0.000000e+00> : vector<8x8xf32>
    %28 = tpu.matmul %27, %16, %cst_13 {dimension_numbers = #tpu.dot_dimension_numbers<[1], [0], [0], [1], [0, 0, 1, 1], [], []>} : vector<8x8xf32>, vector<8x8xf32>, vector<8x8xf32> -> vector<8x8xf32>
    %c0_14 = arith.constant 0 : index
    %c0_15 = arith.constant 0 : index
    %29 = vector.load %arg16[%c0_14, %c0_15] : memref<8x32xf32, #tpu.memory_space<vmem>>, vector<8x32xf32>
    %c0_16 = arith.constant 0 : index
    %c0_17 = arith.constant 0 : index
    %c0_18 = arith.constant 0 : index
    %30 = vector.load %arg5[%c0_16, %c0_17, %c0_18] : memref<1x8x32xf32, #tpu.memory_space<vmem>>, vector<1x8x32xf32>
    %31 = vector.shape_cast %30 : vector<1x8x32xf32> to vector<8x32xf32>
    %cst_19 = arith.constant dense<0.000000e+00> : vector<8x32xf32>
    %32 = tpu.matmul %28, %31, %cst_19 {dimension_numbers = #tpu.dot_dimension_numbers<[1], [0], [0], [1], [0, 0, 1, 1], [], []>} : vector<8x8xf32>, vector<8x32xf32>, vector<8x32xf32> -> vector<8x32xf32>
    %33 = arith.addf %29, %32 : vector<8x32xf32>
    %c0_20 = arith.constant 0 : index
    %c0_21 = arith.constant 0 : index
    %34 = vector.load %arg16[%c0_20, %c0_21] : memref<8x32xf32, #tpu.memory_space<vmem>>, vector<8x32xf32>
    tpu.vector_store %arg16[%c0_20, %c0_21], %33 {strides = array<i32>} : memref<8x32xf32, #tpu.memory_space<vmem>>, vector<8x32xf32>,
    %c3_i32 = arith.constant 3 : i32
    %35 = arith.cmpi eq, %arg1, %c3_i32 : i32
    %36 = arith.extui %35 : i1 to i32
    %c0_i32_22 = arith.constant 0 : i32
    %37 = arith.cmpi ne, %36, %c0_i32_22 : i32
    scf.if %37 {
      %c0_23 = arith.constant 0 : index
      %c0_24 = arith.constant 0 : index
      %38 = vector.load %arg16[%c0_23, %c0_24] : memref<8x32xf32, #tpu.memory_space<vmem>>, vector<8x32xf32>
      %c0_25 = arith.constant 0 : index
      %c0_26 = arith.constant 0 : index
      %39 = vector.load %arg6[%c0_25, %c0_26] : memref<1x32xf32, #tpu.memory_space<vmem>>, vector<1x32xf32>
      %40 = vector.broadcast %39 : vector<1x32xf32> to vector<8x32xf32>
      %41 = arith.addf %38, %40 : vector<8x32xf32>
      %42 = arith.addf %1, %41 : vector<8x32xf32>
      %c0_27 = arith.constant 0 : index
      %c0_28 = arith.constant 0 : index
      %43 = vector.load %arg7[%c0_27, %c0_28] : memref<1x32xf32, #tpu.memory_space<vmem>>, vector<1x32xf32>
      %c0_29 = arith.constant 0 : index
      %c0_30 = arith.constant 0 : index
      %44 = vector.load %arg8[%c0_29, %c0_30] : memref<1x32xf32, #tpu.memory_space<vmem>>, vector<1x32xf32>
      %cst_31 = arith.constant dense<0.000000e+00> : vector<8xf32>
      %45 = vector.multi_reduction <add>, %42, %cst_31 [1] : vector<8x32xf32> to vector<8xf32>
      %46 = vector.shape_cast %45 : vector<8xf32> to vector<8x1xf32>
      %cst_32 = arith.constant 3.200000e+01 : f32
      %47 = vector.broadcast %cst_32 : f32 to vector<8x1xf32>
      %48 = arith.divf %46, %47 : vector<8x1xf32>
      %49 = vector.broadcast %48 : vector<8x1xf32> to vector<8x32xf32>
      %50 = arith.subf %42, %49 : vector<8x32xf32>
      %51 = arith.mulf %50, %50 : vector<8x32xf32>
      %cst_33 = arith.constant dense<0.000000e+00> : vector<8xf32>
      %52 = vector.multi_reduction <add>, %51, %cst_33 [1] : vector<8x32xf32> to vector<8xf32>
      %53 = vector.shape_cast %52 : vector<8xf32> to vector<8x1xf32>
      %cst_34 = arith.constant 3.200000e+01 : f32
      %54 = vector.broadcast %cst_34 : f32 to vector<8x1xf32>
      %55 = arith.divf %53, %54 : vector<8x1xf32>
      %56 = vector.broadcast %48 : vector<8x1xf32> to vector<8x32xf32>
      %57 = arith.subf %42, %56 : vector<8x32xf32>
      %cst_35 = arith.constant 9.99999974E-6 : f32
      %58 = vector.broadcast %cst_35 : f32 to vector<8x1xf32>
      %59 = arith.addf %55, %58 : vector<8x1xf32>
      %60 = math.rsqrt %59 : vector<8x1xf32>
      %61 = vector.broadcast %60 : vector<8x1xf32> to vector<8x32xf32>
      %62 = arith.mulf %57, %61 : vector<8x32xf32>
      %63 = vector.broadcast %43 : vector<1x32xf32> to vector<8x32xf32>
      %64 = arith.mulf %62, %63 : vector<8x32xf32>
      %65 = vector.broadcast %44 : vector<1x32xf32> to vector<8x32xf32>
      %66 = arith.addf %64, %65 : vector<8x32xf32>
      %c0_36 = arith.constant 0 : index
      %c0_37 = arith.constant 0 : index
      %67 = vector.load %arg9[%c0_36, %c0_37] : memref<32x64xf32, #tpu.memory_space<vmem>>, vector<32x64xf32>
      %cst_38 = arith.constant dense<0.000000e+00> : vector<8x64xf32>
      %68 = tpu.matmul %66, %67, %cst_38 {dimension_numbers = #tpu.dot_dimension_numbers<[1], [0], [0], [1], [0, 0, 1, 1], [], []>} : vector<8x32xf32>, vector<32x64xf32>, vector<8x64xf32> -> vector<8x64xf32>
      %c0_39 = arith.constant 0 : index
      %c0_40 = arith.constant 0 : index
      %69 = vector.load %arg10[%c0_39, %c0_40] : memref<1x64xf32, #tpu.memory_space<vmem>>, vector<1x64xf32>
      %70 = vector.broadcast %69 : vector<1x64xf32> to vector<8x64xf32>
      %71 = arith.addf %68, %70 : vector<8x64xf32>
      %cst_41 = arith.constant 0.000000e+00 : f32
      %72 = vector.broadcast %cst_41 : f32 to vector<8x64xf32>
      %73 = arith.maximumf %71, %72 : vector<8x64xf32>
      %c0_42 = arith.constant 0 : index
      %c0_43 = arith.constant 0 : index
      %74 = vector.load %arg11[%c0_42, %c0_43] : memref<64x32xf32, #tpu.memory_space<vmem>>, vector<64x32xf32>
      %cst_44 = arith.constant dense<0.000000e+00> : vector<8x32xf32>
      %75 = tpu.matmul %73, %74, %cst_44 {dimension_numbers = #tpu.dot_dimension_numbers<[1], [0], [0], [1], [0, 0, 1, 1], [], []>} : vector<8x64xf32>, vector<64x32xf32>, vector<8x32xf32> -> vector<8x32xf32>
      %c0_45 = arith.constant 0 : index
      %c0_46 = arith.constant 0 : index
      %76 = vector.load %arg12[%c0_45, %c0_46] : memref<1x32xf32, #tpu.memory_space<vmem>>, vector<1x32xf32>
      %77 = vector.broadcast %76 : vector<1x32xf32> to vector<8x32xf32>
      %78 = arith.addf %75, %77 : vector<8x32xf32>
      %79 = arith.addf %66, %78 : vector<8x32xf32>
      %c0_47 = arith.constant 0 : index
      %c0_48 = arith.constant 0 : index
      %80 = vector.load %arg13[%c0_47, %c0_48] : memref<1x32xf32, #tpu.memory_space<vmem>>, vector<1x32xf32>
      %c0_49 = arith.constant 0 : index
      %c0_50 = arith.constant 0 : index
      %81 = vector.load %arg14[%c0_49, %c0_50] : memref<1x32xf32, #tpu.memory_space<vmem>>, vector<1x32xf32>
      %cst_51 = arith.constant dense<0.000000e+00> : vector<8xf32>
      %82 = vector.multi_reduction <add>, %79, %cst_51 [1] : vector<8x32xf32> to vector<8xf32>
      %83 = vector.shape_cast %82 : vector<8xf32> to vector<8x1xf32>
      %cst_52 = arith.constant 3.200000e+01 : f32
      %84 = vector.broadcast %cst_52 : f32 to vector<8x1xf32>
      %85 = arith.divf %83, %84 : vector<8x1xf32>
      %86 = vector.broadcast %85 : vector<8x1xf32> to vector<8x32xf32>
      %87 = arith.subf %79, %86 : vector<8x32xf32>
      %88 = arith.mulf %87, %87 : vector<8x32xf32>
      %cst_53 = arith.constant dense<0.000000e+00> : vector<8xf32>
      %89 = vector.multi_reduction <add>, %88, %cst_53 [1] : vector<8x32xf32> to vector<8xf32>
      %90 = vector.shape_cast %89 : vector<8xf32> to vector<8x1xf32>
      %cst_54 = arith.constant 3.200000e+01 : f32
      %91 = vector.broadcast %cst_54 : f32 to vector<8x1xf32>
      %92 = arith.divf %90, %91 : vector<8x1xf32>
      %93 = vector.broadcast %85 : vector<8x1xf32> to vector<8x32xf32>
      %94 = arith.subf %79, %93 : vector<8x32xf32>
      %cst_55 = arith.constant 9.99999974E-6 : f32
      %95 = vector.broadcast %cst_55 : f32 to vector<8x1xf32>
      %96 = arith.addf %92, %95 : vector<8x1xf32>
      %97 = math.rsqrt %96 : vector<8x1xf32>
      %98 = vector.broadcast %97 : vector<8x1xf32> to vector<8x32xf32>
      %99 = arith.mulf %94, %98 : vector<8x32xf32>
      %100 = vector.broadcast %80 : vector<1x32xf32> to vector<8x32xf32>
      %101 = arith.mulf %99, %100 : vector<8x32xf32>
      %102 = vector.broadcast %81 : vector<1x32xf32> to vector<8x32xf32>
      %103 = arith.addf %101, %102 : vector<8x32xf32>
      %c0_56 = arith.constant 0 : index
      %c0_57 = arith.constant 0 : index
      %c0_58 = arith.constant 0 : index
      %104 = vector.load %arg15[%c0_56, %c0_57, %c0_58] : memref<1x8x32xf32, #tpu.memory_space<vmem>>, vector<1x8x32xf32>
      %105 = vector.shape_cast %104 : vector<1x8x32xf32> to vector<8x32xf32>
      %106 = vector.shape_cast %103 : vector<8x32xf32> to vector<1x8x32xf32>
      tpu.vector_store %arg15[%c0_56, %c0_57, %c0_58], %106 {strides = array<i32>} : memref<1x8x32xf32, #tpu.memory_space<vmem>>, vector<1x8x32xf32>,
    } else {
    }
    return
  }
  func.func @transform_0(%arg0: i32, %arg1: i32) -> (i32, i32, i32) {
    %c0_i32 = arith.constant 0 : i32
    %c0_i32_0 = arith.constant 0 : i32
    %c0_i32_1 = arith.constant 0 : i32
    return %arg0, %c0_i32, %c0_i32_0 : i32, i32, i32
  }
  func.func @transform_1(%arg0: i32, %arg1: i32) -> (i32, i32, i32) {
    %c0_i32 = arith.constant 0 : i32
    %c0_i32_0 = arith.constant 0 : i32
    %c0_i32_1 = arith.constant 0 : i32
    return %arg1, %c0_i32, %c0_i32_0 : i32, i32, i32
  }
  func.func @transform_2(%arg0: i32, %arg1: i32) -> (i32, i32, i32) {
    %c0_i32 = arith.constant 0 : i32
    %c0_i32_0 = arith.constant 0 : i32
    %c0_i32_1 = arith.constant 0 : i32
    return %arg1, %c0_i32, %c0_i32_0 : i32, i32, i32
  }
  func.func @transform_3(%arg0: i32, %arg1: i32) -> (i32, i32, i32) {
    %c0_i32 = arith.constant 0 : i32
    %c0_i32_0 = arith.constant 0 : i32
    %c0_i32_1 = arith.constant 0 : i32
    return %arg1, %c0_i32, %c0_i32_0 : i32, i32, i32
  }
  func.func @transform_4(%arg0: i32, %arg1: i32) -> (i32, i32) {
    %c0_i32 = arith.constant 0 : i32
    %c0_i32_0 = arith.constant 0 : i32
    %c0_i32_1 = arith.constant 0 : i32
    return %c0_i32, %c0_i32_0 : i32, i32
  }
  func.func @transform_5(%arg0: i32, %arg1: i32) -> (i32, i32) {
    %c0_i32 = arith.constant 0 : i32
    %c0_i32_0 = arith.constant 0 : i32
    %c0_i32_1 = arith.constant 0 : i32
    return %c0_i32, %c0_i32_0 : i32, i32
  }
  func.func @transform_6(%arg0: i32, %arg1: i32) -> (i32, i32) {
    %c0_i32 = arith.constant 0 : i32
    %c0_i32_0 = arith.constant 0 : i32
    %c0_i32_1 = arith.constant 0 : i32
    return %c0_i32, %c0_i32_0 : i32, i32
  }
  func.func @transform_7(%arg0: i32, %arg1: i32) -> (i32, i32) {
    %c0_i32 = arith.constant 0 : i32
    %c0_i32_0 = arith.constant 0 : i32
    %c0_i32_1 = arith.constant 0 : i32
    return %c0_i32, %c0_i32_0 : i32, i32
  }
  func.func @transform_8(%arg0: i32, %arg1: i32) -> (i32, i32) {
    %c0_i32 = arith.constant 0 : i32
    %c0_i32_0 = arith.constant 0 : i32
    %c0_i32_1 = arith.constant 0 : i32
    return %c0_i32, %c0_i32_0 : i32, i32
  }
  func.func @transform_9(%arg0: i32, %arg1: i32) -> (i32, i32) {
    %c0_i32 = arith.constant 0 : i32
    %c0_i32_0 = arith.constant 0 : i32
    %c0_i32_1 = arith.constant 0 : i32
    return %c0_i32, %c0_i32_0 : i32, i32
  }
  func.func @transform_10(%arg0: i32, %arg1: i32) -> (i32, i32) {
    %c0_i32 = arith.constant 0 : i32
    %c0_i32_0 = arith.constant 0 : i32
    %c0_i32_1 = arith.constant 0 : i32
    return %c0_i32, %c0_i32_0 : i32, i32
  }
  func.func @transform_11(%arg0: i32, %arg1: i32) -> (i32, i32) {
    %c0_i32 = arith.constant 0 : i32
    %c0_i32_0 = arith.constant 0 : i32
    %c0_i32_1 = arith.constant 0 : i32
    return %c0_i32, %c0_i32_0 : i32, i32
  }
  func.func @transform_12(%arg0: i32, %arg1: i32) -> (i32, i32) {
    %c0_i32 = arith.constant 0 : i32
    %c0_i32_0 = arith.constant 0 : i32
    %c0_i32_1 = arith.constant 0 : i32
    return %c0_i32, %c0_i32_0 : i32, i32
  }
  func.func @transform_13(%arg0: i32, %arg1: i32) -> (i32, i32, i32) {
    %c0_i32 = arith.constant 0 : i32
    %c0_i32_0 = arith.constant 0 : i32
    %c0_i32_1 = arith.constant 0 : i32
    return %arg0, %c0_i32, %c0_i32_0 : i32, i32, i32
  }
}

</mosaic_0001>

<llo_original>
// kernel: tpu_custom_call.1
$region0: #{tpu_custom_call.1}
  #allocation0 [shape = 'u32[]', space=smem, size = 0x4, offset = 0x4, fixed_abs, tag = 'smem constant byte address 0x4 - core index']
  #allocation1 [shape = 'u32[144,128]{1,0:T(1,128)}', space=vmem, size = 0x12000, scoped, tag = 'internal scratch']
  #allocation2 [shape = 'f32[8,32]{1,0:T(8,128)}', space=vmem, size = 0x1000, scoped, tag = 'scratch operand']
  %s0 = inlined_call_operand.vmem [shape: f32[2,8,32], index: 0, kind: input, shape index: {}]
  %s1 = inlined_call_operand.vmem [shape: f32[4,32,24], index: 1, kind: input, shape index: {}]
  %s2 = inlined_call_operand.vmem [shape: f32[4,1,24], index: 2, kind: input, shape index: {}]
  %s3 = inlined_call_operand.vmem [shape: f32[4,8,32], index: 3, kind: input, shape index: {}]
  %s4 = inlined_call_operand.vmem [shape: f32[1,32], index: 4, kind: input, shape index: {}]
  %s5 = inlined_call_operand.vmem [shape: f32[1,32], index: 5, kind: input, shape index: {}]
  %s6 = inlined_call_operand.vmem [shape: f32[1,32], index: 6, kind: input, shape index: {}]
  %s7 = inlined_call_operand.vmem [shape: f32[32,64], index: 7, kind: input, shape index: {}]
  %s8 = inlined_call_operand.vmem [shape: f32[1,64], index: 8, kind: input, shape index: {}]
  %s9 = inlined_call_operand.vmem [shape: f32[64,32], index: 9, kind: input, shape index: {}]
  %s10 = inlined_call_operand.vmem [shape: f32[1,32], index: 10, kind: input, shape index: {}]
  %s11 = inlined_call_operand.vmem [shape: f32[1,32], index: 11, kind: input, shape index: {}]
  %s12 = inlined_call_operand.vmem [shape: f32[1,32], index: 12, kind: input, shape index: {}]
  %s13 = inlined_call_operand.hbm [shape: f32[2,8,32], index: 13, kind: output, shape index: {}]
  %s14 = sld [smem:[#allocation0]]
  $region93: #{tpu_custom_call.1} parent=0
    _
  %s16 = ssub.s32 1, %s14
  %s17 = scalar_select 0, %s16, %s14
  $region1: #{tpu_custom_call.1} parent=0
    #allocation3 [shape = 'u8[8192]{0}', space=vmem, size = 0x2000, scoped, tag = 'output window, operand 0']
    #allocation4 [shape = 's32[2]{0}', space=sflag, size = 0x8, scoped, tag = 'scoped memory for tpu_custom_call.1']
    %18 = vsyncpa [#allocation4], 0
    %s19 = scalar_lea.sflag [#allocation4], 1
    %20 = vsyncpa %s19, 0
    loop: start=0, step=1, limit=10
    $region2: #{tpu_custom_call.1} parent=1 // loop_pre_header
      _
    $region3: #{tpu_custom_call.1} parent=1 // loop_header
      %s22 = sphi 0, %s26
      %p23 = scmp.ge.s32.totalorder %s22, 10
      %s29 = sphi 0, %s41
      %s30 = sphi 0, %s37
      %s31 = sphi 0, %s29
      %s32 = sphi 0, %s30
      %s33 = sphi 0, %s31
      %s34 = sphi 0, %s32
      %s44 = sphi 0, %s46
      %s47 = sphi 0, %s44
      %s48 = sphi 0, %s47
      %s64 = sphi 0, %s48
      %s70 = sphi 0, %s72
      %s73 = sphi 0, %s70
      %s74 = sphi 0, %s73
      %s90 = sphi 0, %s74
      %s96 = sphi 0, %s98
      %s99 = sphi 0, %s96
      %s100 = sphi 0, %s99
      %s116 = sphi 0, %s100
      %s122 = sphi 0, %s124
      %s125 = sphi 0, %s122
      %s126 = sphi 0, %s125
      %s142 = sphi 0, %s126
      %s146 = sphi 0, %s146
      %s148 = sphi 0, %s146
      %s149 = sphi 0, %s148
      %s163 = sphi 0, %s149
      %s167 = sphi 0, %s167
      %s169 = sphi 0, %s167
      %s170 = sphi 0, %s169
      %s184 = sphi 0, %s170
      %s188 = sphi 0, %s188
      %s190 = sphi 0, %s188
      %s191 = sphi 0, %s190
      %s205 = sphi 0, %s191
      %s209 = sphi 0, %s209
      %s211 = sphi 0, %s209
      %s212 = sphi 0, %s211
      %s226 = sphi 0, %s212
      %s230 = sphi 0, %s230
      %s232 = sphi 0, %s230
      %s233 = sphi 0, %s232
      %s247 = sphi 0, %s233
      %s251 = sphi 0, %s251
      %s253 = sphi 0, %s251
      %s254 = sphi 0, %s253
      %s268 = sphi 0, %s254
      %s272 = sphi 0, %s272
      %s274 = sphi 0, %s272
      %s275 = sphi 0, %s274
      %s289 = sphi 0, %s275
      %s293 = sphi 0, %s293
      %s295 = sphi 0, %s293
      %s296 = sphi 0, %s295
      %s310 = sphi 0, %s296
      %s314 = sphi 0, %s314
      %s316 = sphi 0, %s314
      %s317 = sphi 0, %s316
      %s331 = sphi 0, %s317
      %s337 = sphi 0, %s339
      %s340 = sphi 0, %s337
      %s341 = sphi 0, %s340
      %s357 = sphi 0, %s341
    $region4: #{tpu_custom_call.1} parent=1 // loop_header_branch
      %25 = sbr.rel (%p23) target = $region8
    $region5: #{tpu_custom_call.1} parent=1 // loop_body
      %s27 = ssub.s32 %s22, 1
      %s28 = ssub.s32 %s22, 2
      %s35 = sadd.s32 1, %s30
      %p36 = scmp.ge.s32.totalorder %s35, 4
      %s37 = scalar_select %p36, 0, %s35
      %s38 = sadd.s32 1, %s29
      %s39 = scalar_select %p36, %s38, %s29
      %p40 = scmp.ge.s32.totalorder %s39, 2
      %s41 = scalar_select %p40, 0, %s39
      %s42 = ssub.s32 %s29, %s41
      %p43 = scmp.eq.s32.totalorder %s42, 0
      %s45 = sadd.s32 %s44, 1
      %s46 = scalar_select %p43, %s44, %s45
      %p49 = pneg %p43
      %p50 = scmp.eq.s32.totalorder %s22, 7
      %p51 = por %p49, %p50
      %p52 = scmp.ne.s32.totalorder %s44, %s47
      %p53 = scmp.eq.s32.totalorder %s22, 0
      %p54 = por %p52, %p53
      %p55 = scmp.ne.s32.totalorder %s44, %s47
      %p56 = scmp.eq.s32.totalorder %s27, 7
      %p57 = por %p55, %p56
      %p58 = scmp.ne.s32.totalorder %s47, %s48
      %p59 = scmp.eq.s32.totalorder %s27, 0
      %p60 = por %p58, %p59
      %p61 = scmp.ne.s32.totalorder %s47, %s48
      %p62 = scmp.eq.s32.totalorder %s28, 7
      %p63 = por %p61, %p62
      %p65 = scmp.ne.s32.totalorder %s48, %s64
      %p66 = scmp.eq.s32.totalorder %s28, 0
      %p67 = por %p65, %p66
      %s68 = ssub.s32 %s30, %s37
      %p69 = scmp.eq.s32.totalorder %s68, 0
      %s71 = sadd.s32 %s70, 1
      %s72 = scalar_select %p69, %s70, %s71
      %p75 = pneg %p69
      %p76 = scmp.eq.s32.totalorder %s22, 7
      %p77 = por %p75, %p76
      %p78 = scmp.ne.s32.totalorder %s70, %s73
      %p79 = scmp.eq.s32.totalorder %s22, 0
      %p80 = por %p78, %p79
      %p81 = scmp.ne.s32.totalorder %s70, %s73
      %p82 = scmp.eq.s32.totalorder %s27, 7
      %p83 = por %p81, %p82
      %p84 = scmp.ne.s32.totalorder %s73, %s74
      %p85 = scmp.eq.s32.totalorder %s27, 0
      %p86 = por %p84, %p85
      %p87 = scmp.ne.s32.totalorder %s73, %s74
      %p88 = scmp.eq.s32.totalorder %s28, 7
      %p89 = por %p87, %p88
      %p91 = scmp.ne.s32.totalorder %s74, %s90
      %p92 = scmp.eq.s32.totalorder %s28, 0
      %p93 = por %p91, %p92
      %s94 = ssub.s32 %s30, %s37
      %p95 = scmp.eq.s32.totalorder %s94, 0
      %s97 = sadd.s32 %s96, 1
      %s98 = scalar_select %p95, %s96, %s97
      %p101 = pneg %p95
      %p102 = scmp.eq.s32.totalorder %s22, 7
      %p103 = por %p101, %p102
      %p104 = scmp.ne.s32.totalorder %s96, %s99
      %p105 = scmp.eq.s32.totalorder %s22, 0
      %p106 = por %p104, %p105
      %p107 = scmp.ne.s32.totalorder %s96, %s99
      %p108 = scmp.eq.s32.totalorder %s27, 7
      %p109 = por %p107, %p108
      %p110 = scmp.ne.s32.totalorder %s99, %s100
      %p111 = scmp.eq.s32.totalorder %s27, 0
      %p112 = por %p110, %p111
      %p113 = scmp.ne.s32.totalorder %s99, %s100
      %p114 = scmp.eq.s32.totalorder %s28, 7
      %p115 = por %p113, %p114
      %p117 = scmp.ne.s32.totalorder %s100, %s116
      %p118 = scmp.eq.s32.totalorder %s28, 0
      %p119 = por %p117, %p118
      %s120 = ssub.s32 %s30, %s37
      %p121 = scmp.eq.s32.totalorder %s120, 0
      %s123 = sadd.s32 %s122, 1
      %s124 = scalar_select %p121, %s122, %s123
      %p127 = pneg %p121
      %p128 = scmp.eq.s32.totalorder %s22, 7
      %p129 = por %p127, %p128
      %p130 = scmp.ne.s32.totalorder %s122, %s125
      %p131 = scmp.eq.s32.totalorder %s22, 0
      %p132 = por %p130, %p131
      %p133 = scmp.ne.s32.totalorder %s122, %s125
      %p134 = scmp.eq.s32.totalorder %s27, 7
      %p135 = por %p133, %p134
      %p136 = scmp.ne.s32.totalorder %s125, %s126
      %p137 = scmp.eq.s32.totalorder %s27, 0
      %p138 = por %p136, %p137
      %p139 = scmp.ne.s32.totalorder %s125, %s126
      %p140 = scmp.eq.s32.totalorder %s28, 7
      %p141 = por %p139, %p140
      %p143 = scmp.ne.s32.totalorder %s126, %s142
      %p144 = scmp.eq.s32.totalorder %s28, 0
      %p145 = por %p143, %p144
      %s147 = sadd.s32 %s146, 1
      %p150 = scmp.eq.s32.totalorder %s22, 7
      %p151 = scmp.ne.s32.totalorder %s146, %s148
      %p152 = scmp.eq.s32.totalorder %s22, 0
      %p153 = por %p151, %p152
      %p154 = scmp.ne.s32.totalorder %s146, %s148
      %p155 = scmp.eq.s32.totalorder %s27, 7
      %p156 = por %p154, %p155
      %p157 = scmp.ne.s32.totalorder %s148, %s149
      %p158 = scmp.eq.s32.totalorder %s27, 0
      %p159 = por %p157, %p158
      %p160 = scmp.ne.s32.totalorder %s148, %s149
      %p161 = scmp.eq.s32.totalorder %s28, 7
      %p162 = por %p160, %p161
      %p164 = scmp.ne.s32.totalorder %s149, %s163
      %p165 = scmp.eq.s32.totalorder %s28, 0
      %p166 = por %p164, %p165
      %s168 = sadd.s32 %s167, 1
      %p171 = scmp.eq.s32.totalorder %s22, 7
      %p172 = scmp.ne.s32.totalorder %s167, %s169
      %p173 = scmp.eq.s32.totalorder %s22, 0
      %p174 = por %p172, %p173
      %p175 = scmp.ne.s32.totalorder %s167, %s169
      %p176 = scmp.eq.s32.totalorder %s27, 7
      %p177 = por %p175, %p176
      %p178 = scmp.ne.s32.totalorder %s169, %s170
      %p179 = scmp.eq.s32.totalorder %s27, 0
      %p180 = por %p178, %p179
      %p181 = scmp.ne.s32.totalorder %s169, %s170
      %p182 = scmp.eq.s32.totalorder %s28, 7
      %p183 = por %p181, %p182
      %p185 = scmp.ne.s32.totalorder %s170, %s184
      %p186 = scmp.eq.s32.totalorder %s28, 0
      %p187 = por %p185, %p186
      %s189 = sadd.s32 %s188, 1
      %p192 = scmp.eq.s32.totalorder %s22, 7
      %p193 = scmp.ne.s32.totalorder %s188, %s190
      %p194 = scmp.eq.s32.totalorder %s22, 0
      %p195 = por %p193, %p194
      %p196 = scmp.ne.s32.totalorder %s188, %s190
      %p197 = scmp.eq.s32.totalorder %s27, 7
      %p198 = por %p196, %p197
      %p199 = scmp.ne.s32.totalorder %s190, %s191
      %p200 = scmp.eq.s32.totalorder %s27, 0
      %p201 = por %p199, %p200
      %p202 = scmp.ne.s32.totalorder %s190, %s191
      %p203 = scmp.eq.s32.totalorder %s28, 7
      %p204 = por %p202, %p203
      %p206 = scmp.ne.s32.totalorder %s191, %s205
      %p207 = scmp.eq.s32.totalorder %s28, 0
      %p208 = por %p206, %p207
      %s210 = sadd.s32 %s209, 1
      %p213 = scmp.eq.s32.totalorder %s22, 7
      %p214 = scmp.ne.s32.totalorder %s209, %s211
      %p215 = scmp.eq.s32.totalorder %s22, 0
      %p216 = por %p214, %p215
      %p217 = scmp.ne.s32.totalorder %s209, %s211
      %p218 = scmp.eq.s32.totalorder %s27, 7
      %p219 = por %p217, %p218
      %p220 = scmp.ne.s32.totalorder %s211, %s212
      %p221 = scmp.eq.s32.totalorder %s27, 0
      %p222 = por %p220, %p221
      %p223 = scmp.ne.s32.totalorder %s211, %s212
      %p224 = scmp.eq.s32.totalorder %s28, 7
      %p225 = por %p223, %p224
      %p227 = scmp.ne.s32.totalorder %s212, %s226
      %p228 = scmp.eq.s32.totalorder %s28, 0
      %p229 = por %p227, %p228
      %s231 = sadd.s32 %s230, 1
      %p234 = scmp.eq.s32.totalorder %s22, 7
      %p235 = scmp.ne.s32.totalorder %s230, %s232
      %p236 = scmp.eq.s32.totalorder %s22, 0
      %p237 = por %p235, %p236
      %p238 = scmp.ne.s32.totalorder %s230, %s232
      %p239 = scmp.eq.s32.totalorder %s27, 7
      %p240 = por %p238, %p239
      %p241 = scmp.ne.s32.totalorder %s232, %s233
      %p242 = scmp.eq.s32.totalorder %s27, 0
      %p243 = por %p241, %p242
      %p244 = scmp.ne.s32.totalorder %s232, %s233
      %p245 = scmp.eq.s32.totalorder %s28, 7
      %p246 = por %p244, %p245
      %p248 = scmp.ne.s32.totalorder %s233, %s247
      %p249 = scmp.eq.s32.totalorder %s28, 0
      %p250 = por %p248, %p249
      %s252 = sadd.s32 %s251, 1
      %p255 = scmp.eq.s32.totalorder %s22, 7
      %p256 = scmp.ne.s32.totalorder %s251, %s253
      %p257 = scmp.eq.s32.totalorder %s22, 0
      %p258 = por %p256, %p257
      %p259 = scmp.ne.s32.totalorder %s251, %s253
      %p260 = scmp.eq.s32.totalorder %s27, 7
      %p261 = por %p259, %p260
      %p262 = scmp.ne.s32.totalorder %s253, %s254
      %p263 = scmp.eq.s32.totalorder %s27, 0
      %p264 = por %p262, %p263
      %p265 = scmp.ne.s32.totalorder %s253, %s254
      %p266 = scmp.eq.s32.totalorder %s28, 7
      %p267 = por %p265, %p266
      %p269 = scmp.ne.s32.totalorder %s254, %s268
      %p270 = scmp.eq.s32.totalorder %s28, 0
      %p271 = por %p269, %p270
      %s273 = sadd.s32 %s272, 1
      %p276 = scmp.eq.s32.totalorder %s22, 7
      %p277 = scmp.ne.s32.totalorder %s272, %s274
      %p278 = scmp.eq.s32.totalorder %s22, 0
      %p279 = por %p277, %p278
      %p280 = scmp.ne.s32.totalorder %s272, %s274
      %p281 = scmp.eq.s32.totalorder %s27, 7
      %p282 = por %p280, %p281
      %p283 = scmp.ne.s32.totalorder %s274, %s275
      %p284 = scmp.eq.s32.totalorder %s27, 0
      %p285 = por %p283, %p284
      %p286 = scmp.ne.s32.totalorder %s274, %s275
      %p287 = scmp.eq.s32.totalorder %s28, 7
      %p288 = por %p286, %p287
      %p290 = scmp.ne.s32.totalorder %s275, %s289
      %p291 = scmp.eq.s32.totalorder %s28, 0
      %p292 = por %p290, %p291
      %s294 = sadd.s32 %s293, 1
      %p297 = scmp.eq.s32.totalorder %s22, 7
      %p298 = scmp.ne.s32.totalorder %s293, %s295
      %p299 = scmp.eq.s32.totalorder %s22, 0
      %p300 = por %p298, %p299
      %p301 = scmp.ne.s32.totalorder %s293, %s295
      %p302 = scmp.eq.s32.totalorder %s27, 7
      %p303 = por %p301, %p302
      %p304 = scmp.ne.s32.totalorder %s295, %s296
      %p305 = scmp.eq.s32.totalorder %s27, 0
      %p306 = por %p304, %p305
      %p307 = scmp.ne.s32.totalorder %s295, %s296
      %p308 = scmp.eq.s32.totalorder %s28, 7
      %p309 = por %p307, %p308
      %p311 = scmp.ne.s32.totalorder %s296, %s310
      %p312 = scmp.eq.s32.totalorder %s28, 0
      %p313 = por %p311, %p312
      %s315 = sadd.s32 %s314, 1
      %p318 = scmp.eq.s32.totalorder %s22, 7
      %p319 = scmp.ne.s32.totalorder %s314, %s316
      %p320 = scmp.eq.s32.totalorder %s22, 0
      %p321 = por %p319, %p320
      %p322 = scmp.ne.s32.totalorder %s314, %s316
      %p323 = scmp.eq.s32.totalorder %s27, 7
      %p324 = por %p322, %p323
      %p325 = scmp.ne.s32.totalorder %s316, %s317
      %p326 = scmp.eq.s32.totalorder %s27, 0
      %p327 = por %p325, %p326
      %p328 = scmp.ne.s32.totalorder %s316, %s317
      %p329 = scmp.eq.s32.totalorder %s28, 7
      %p330 = por %p328, %p329
      %p332 = scmp.ne.s32.totalorder %s317, %s331
      %p333 = scmp.eq.s32.totalorder %s28, 0
      %p334 = por %p332, %p333
      %s335 = ssub.s32 %s29, %s41
      %p336 = scmp.eq.s32.totalorder %s335, 0
      %s338 = sadd.s32 %s337, 1
      %s339 = scalar_select %p336, %s337, %s338
      %p342 = pneg %p336
      %p343 = scmp.eq.s32.totalorder %s22, 7
      %p344 = por %p342, %p343
      %p345 = scmp.ne.s32.totalorder %s337, %s340
      %p346 = scmp.eq.s32.totalorder %s22, 0
      %p347 = por %p345, %p346
      %p348 = scmp.ne.s32.totalorder %s337, %s340
      %p349 = scmp.eq.s32.totalorder %s27, 7
      %p350 = por %p348, %p349
      %p351 = scmp.ne.s32.totalorder %s340, %s341
      %p352 = scmp.eq.s32.totalorder %s27, 0
      %p353 = por %p351, %p352
      %p354 = scmp.ne.s32.totalorder %s340, %s341
      %p355 = scmp.eq.s32.totalorder %s28, 7
      %p356 = por %p354, %p355
      %p358 = scmp.ne.s32.totalorder %s341, %s357
      %p359 = scmp.eq.s32.totalorder %s28, 0
      %p360 = por %p358, %p359
      %p361 = scmp.le.s32.totalorder 1, %s22
      %p362 = scmp.lt.s32.totalorder %s22, 9
      %p363 = pnand %p361, %p362
      %p364 = pneg %p363
      // Predicated region
      $region9: #{tpu_custom_call.1} parent=5 // pred_check
        _
      $region10: #{tpu_custom_call.1} parent=5 // pred_check_branch
        %366 = sbr.rel (%p363) target = $region12
      $region11: #{tpu_custom_call.1} parent=5 // pred_region
        %s367 = ssub.s32 %s22, 1
        // Predicated region
        $region13: #{tpu_custom_call.1} parent=11 // pred_check
          %p368 = pneg %p159
        $region14: #{tpu_custom_call.1} parent=11 // pred_check_branch
          %370 = sbr.rel (%p368) target = $region16
        $region15: #{tpu_custom_call.1} parent=11 // pred_region
          _
        $region16: #{tpu_custom_call.1} parent=11 // pred_fallthru
          _
        // Predicated region
        $region17: #{tpu_custom_call.1} parent=11 // pred_check
          %p371 = pneg %p180
        $region18: #{tpu_custom_call.1} parent=11 // pred_check_branch
          %373 = sbr.rel (%p371) target = $region20
        $region19: #{tpu_custom_call.1} parent=11 // pred_region
          _
        $region20: #{tpu_custom_call.1} parent=11 // pred_fallthru
          _
        // Predicated region
        $region21: #{tpu_custom_call.1} parent=11 // pred_check
          %p374 = pneg %p201
        $region22: #{tpu_custom_call.1} parent=11 // pred_check_branch
          %376 = sbr.rel (%p374) target = $region24
        $region23: #{tpu_custom_call.1} parent=11 // pred_region
          _
        $region24: #{tpu_custom_call.1} parent=11 // pred_fallthru
          _
        // Predicated region
        $region25: #{tpu_custom_call.1} parent=11 // pred_check
          %p377 = pneg %p222
        $region26: #{tpu_custom_call.1} parent=11 // pred_check_branch
          %379 = sbr.rel (%p377) target = $region28
        $region27: #{tpu_custom_call.1} parent=11 // pred_region
          _
        $region28: #{tpu_custom_call.1} parent=11 // pred_fallthru
          _
        // Predicated region
        $region29: #{tpu_custom_call.1} parent=11 // pred_check
          %p380 = pneg %p243
        $region30: #{tpu_custom_call.1} parent=11 // pred_check_branch
          %382 = sbr.rel (%p380) target = $region32
        $region31: #{tpu_custom_call.1} parent=11 // pred_region
          _
        $region32: #{tpu_custom_call.1} parent=11 // pred_fallthru
          _
        // Predicated region
        $region33: #{tpu_custom_call.1} parent=11 // pred_check
          %p383 = pneg %p264
        $region34: #{tpu_custom_call.1} parent=11 // pred_check_branch
          %385 = sbr.rel (%p383) target = $region36
        $region35: #{tpu_custom_call.1} parent=11 // pred_region
          _
        $region36: #{tpu_custom_call.1} parent=11 // pred_fallthru
          _
        // Predicated region
        $region37: #{tpu_custom_call.1} parent=11 // pred_check
          %p386 = pneg %p285
        $region38: #{tpu_custom_call.1} parent=11 // pred_check_branch
          %388 = sbr.rel (%p386) target = $region40
        $region39: #{tpu_custom_call.1} parent=11 // pred_region
          _
        $region40: #{tpu_custom_call.1} parent=11 // pred_fallthru
          _
        // Predicated region
        $region41: #{tpu_custom_call.1} parent=11 // pred_check
          %p389 = pneg %p306
        $region42: #{tpu_custom_call.1} parent=11 // pred_check_branch
          %391 = sbr.rel (%p389) target = $region44
        $region43: #{tpu_custom_call.1} parent=11 // pred_region
          _
        $region44: #{tpu_custom_call.1} parent=11 // pred_fallthru
          _
        // Predicated region
        $region45: #{tpu_custom_call.1} parent=11 // pred_check
          %p392 = pneg %p327
        $region46: #{tpu_custom_call.1} parent=11 // pred_check_branch
          %394 = sbr.rel (%p392) target = $region48
        $region47: #{tpu_custom_call.1} parent=11 // pred_region
          _
        $region48: #{tpu_custom_call.1} parent=11 // pred_fallthru
          _
      $region12: #{tpu_custom_call.1} parent=5 // pred_fallthru
        _
      %p395 = scmp.lt.s32.totalorder %s22, 8
      // Predicated region
      $region49: #{tpu_custom_call.1} parent=5 // pred_check
        %p396 = pneg %p395
      $region50: #{tpu_custom_call.1} parent=5 // pred_check_branch
        %398 = sbr.rel (%p396) target = $region52
      $region51: #{tpu_custom_call.1} parent=5 // pred_region
        // Predicated region
        $region53: #{tpu_custom_call.1} parent=51 // pred_check
          %p399 = pneg %p54
        $region54: #{tpu_custom_call.1} parent=51 // pred_check_branch
          %401 = sbr.rel (%p399) target = $region56
        $region55: #{tpu_custom_call.1} parent=51 // pred_region
          %p402 = scmp.lt.s32.totalorder %s29, 1
          %s403 = scalar_select %p402, %s29, 1
          %s404 = smul.addr %s403, 8
          %s405 = scalar_lea.vmem %s0, %s404
        $region56: #{tpu_custom_call.1} parent=51 // pred_fallthru
          _
        // Predicated region
        $region57: #{tpu_custom_call.1} parent=51 // pred_check
          %p406 = pneg %p80
        $region58: #{tpu_custom_call.1} parent=51 // pred_check_branch
          %408 = sbr.rel (%p406) target = $region60
        $region59: #{tpu_custom_call.1} parent=51 // pred_region
          %p409 = scmp.lt.s32.totalorder %s30, 3
          %s410 = scalar_select %p409, %s30, 3
          %s411 = smul.addr %s410, 4
          %s412 = smul.addr %s411, 8
          %s413 = scalar_lea.vmem %s1, %s412
        $region60: #{tpu_custom_call.1} parent=51 // pred_fallthru
          _
        // Predicated region
        $region61: #{tpu_custom_call.1} parent=51 // pred_check
          %p414 = pneg %p106
        $region62: #{tpu_custom_call.1} parent=51 // pred_check_branch
          %416 = sbr.rel (%p414) target = $region64
        $region63: #{tpu_custom_call.1} parent=51 // pred_region
          %p417 = scmp.lt.s32.totalorder %s30, 3
          %s418 = scalar_select %p417, %s30, 3
          %s419 = scalar_lea.vmem %s2, %s418
        $region64: #{tpu_custom_call.1} parent=51 // pred_fallthru
          _
        // Predicated region
        $region65: #{tpu_custom_call.1} parent=51 // pred_check
          %p420 = pneg %p132
        $region66: #{tpu_custom_call.1} parent=51 // pred_check_branch
          %422 = sbr.rel (%p420) target = $region68
        $region67: #{tpu_custom_call.1} parent=51 // pred_region
          %p423 = scmp.lt.s32.totalorder %s30, 3
          %s424 = scalar_select %p423, %s30, 3
          %s425 = smul.addr %s424, 8
          %s426 = scalar_lea.vmem %s3, %s425
        $region68: #{tpu_custom_call.1} parent=51 // pred_fallthru
          _
      $region52: #{tpu_custom_call.1} parent=5 // pred_fallthru
        _
      %p427 = scmp.le.s32.totalorder 1, %s22
      %p428 = scmp.lt.s32.totalorder %s22, 9
      %p429 = pnand %p427, %p428
      %p430 = pneg %p429
      // Predicated region
      $region69: #{tpu_custom_call.1} parent=5 // pred_check
        _
      $region70: #{tpu_custom_call.1} parent=5 // pred_check_branch
        %432 = sbr.rel (%p429) target = $region72
      $region71: #{tpu_custom_call.1} parent=5 // pred_region
        %s433 = ssub.s32 %s22, 1
        %p434 = scmp.lt.s32.totalorder %s31, 1
        %s435 = scalar_select %p434, %s31, 1
        %s436 = smul.addr %s435, 8
        %s437 = scalar_lea.vmem %s0, %s436
        %p438 = pneg %p60
        %p439 = pneg %p57
        %p440 = scmp.lt.s32.totalorder %s32, 3
        %s441 = scalar_select %p440, %s32, 3
        %s442 = smul.addr %s441, 4
        %s443 = smul.addr %s442, 8
        %s444 = scalar_lea.vmem %s1, %s443
        %p445 = pneg %p86
        %p446 = pneg %p83
        %p447 = scmp.lt.s32.totalorder %s32, 3
        %s448 = scalar_select %p447, %s32, 3
        %s449 = scalar_lea.vmem %s2, %s448
        %p450 = pneg %p112
        %p451 = pneg %p109
        %p452 = scmp.lt.s32.totalorder %s32, 3
        %s453 = scalar_select %p452, %s32, 3
        %s454 = smul.addr %s453, 8
        %s455 = scalar_lea.vmem %s3, %s454
        %p456 = pneg %p138
        %p457 = pneg %p135
        %p458 = pneg %p159
        %p459 = pneg %p156
        %p460 = pneg %p180
        %p461 = pneg %p177
        %p462 = pneg %p201
        %p463 = pneg %p198
        %p464 = pneg %p222
        %p465 = pneg %p219
        %p466 = pneg %p243
        %p467 = pneg %p240
        %p468 = pneg %p264
        %p469 = pneg %p261
        %p470 = pneg %p285
        %p471 = pneg %p282
        %p472 = pneg %p306
        %p473 = pneg %p303
        %p474 = pneg %p327
        %p475 = pneg %p324
        %p476 = pneg %p353
        %p477 = pneg %p350
        %s478 = sand.u32 %s340, 1
        %s479 = scalar_lea.sflag [#allocation4], %s478
        %s480 = sand.u32 %s340, 1
        %s481 = smul.addr %s480, 8
        %s482 = scalar_lea.vmem [#allocation3], %s481
        %p483 = scmp.lt.s32.totalorder %s31, 1
        %s484 = scalar_select %p483, %s31, 1
        %s485 = smul.addr %s484, 8
        %s486 = scalar_lea.vmem %s0, %s485
        %p487 = scmp.lt.s32.totalorder %s32, 3
        %s488 = scalar_select %p487, %s32, 3
        %s489 = smul.addr %s488, 4
        %s490 = smul.addr %s489, 8
        %s491 = scalar_lea.vmem %s1, %s490
        %p492 = scmp.lt.s32.totalorder %s32, 3
        %s493 = scalar_select %p492, %s32, 3
        %s494 = scalar_lea.vmem %s2, %s493
        %p495 = scmp.lt.s32.totalorder %s32, 3
        %s496 = scalar_select %p495, %s32, 3
        %s497 = smul.addr %s496, 8
        %s498 = scalar_lea.vmem %s3, %s497
        %v499 = vld [vmem:[%s486] sm:$0xff]
        %p500 = scmp.eq.s32.totalorder %s32, 0
        // Predicated region
        $region73: #{tpu_custom_call.1} parent=71 // pred_check
          %p501 = pneg %p500
        $region74: #{tpu_custom_call.1} parent=71 // pred_check_branch
          %503 = sbr.rel (%p501) target = $region76
        $region75: #{tpu_custom_call.1} parent=71 // pred_region
          %vm504 = vcmask 261120
          %505 = vst.msk [vmem:[#allocation2] sm:$0xff] %vm504, 0.0
        $region76: #{tpu_custom_call.1} parent=71 // pred_fallthru
          _
        %v506 = vld [vmem:[%s491] sm:$0xff]
        %v507 = vld [vmem:[%s491 + $0x8] sm:$0xff]
        %v508 = vld [vmem:[%s491 + $0x10] sm:$0xff]
        %v509 = vld [vmem:[%s491 + $0x18] sm:$0xff]
        %v510 = vld [vmem:[%s494] sm:$0x1]
        %v512 = vlaneseq
        %v513 = vshrl.u32 %v512, 7
        %v514 = vsub.s32 0, %v513
        %v515 = vrot.slane %v510, %v514
        %vm517 = vcmask 261120
        %v519 = vsel %vm517, %v499, 0
        %521 = vmatprep.subr.mxu0 0.0
        %522 = vmatpush1.msra.mxu0 %v506
        %523 = vmatprep.subr.mxu0 0.0
        %524 = vmatpush1.msra.mxu0 %v507
        %525 = vmatprep.subr.mxu0 0.0
        %526 = vmatpush1.msra.mxu0 %v508
        %527 = vmatprep.subr.mxu0 0.0
        %528 = vmatpush1.msra.mxu0 %v509
        %529 = vmatprep.subr.mxu0 0.0
        %530 = vmatpush1.msra.mxu0 0.0
        %531 = vmatprep.subr.mxu0 0.0
        %532 = vmatpush1.msra.mxu0 0.0
        %533 = vmatprep.subr.mxu0 0.0
        %534 = vmatpush1.msra.mxu0 0.0
        %535 = vmatprep.subr.mxu0 0.0
        %536 = vmatpush1.msra.mxu0 0.0
        %537 = vmatprep.subr.mxu0 0.0
        %538 = vmatpush1.msra.mxu0 0.0
        %539 = vmatprep.subr.mxu0 0.0
        %540 = vmatpush1.msra.mxu0 0.0
        %541 = vmatprep.subr.mxu0 0.0
        %542 = vmatpush1.msra.mxu0 0.0
        %543 = vmatprep.subr.mxu0 0.0
        %544 = vmatpush1.msra.mxu0 0.0
        %545 = vmatprep.subr.mxu0 0.0
        %546 = vmatpush1.msra.mxu0 0.0
        %547 = vmatprep.subr.mxu0 0.0
        %548 = vmatpush1.msra.mxu0 0.0
        %549 = vmatprep.subr.mxu0 0.0
        %550 = vmatpush1.msra.mxu0 0.0
        %551 = vmatprep.subr.mxu0 0.0
        %552 = vmatpush1.msra.mxu0 0.0
        %553 = vmatprep.subr.mxu0 0.0
        %554 = vmatpush1.msra.mxu0 0.0
        %555 = vmatprep.subr.mxu0 0.0
        %556 = vmatpush1.msra.mxu0 0.0
        %557 = vmatprep.subr.mxu0 0.0
        %558 = vmatpush1.msra.mxu0 0.0
        %559 = vmatprep.subr.mxu0 0.0
        %560 = vmatpush1.msra.mxu0 0.0
        %561 = vmatprep.subr.mxu0 0.0
        %562 = vmatpush1.msra.mxu0 0.0
        %563 = vmatprep.subr.mxu0 0.0
        %564 = vmatpush1.msra.mxu0 0.0
        %565 = vmatprep.subr.mxu0 0.0
        %566 = vmatpush1.msra.mxu0 0.0
        %567 = vmatprep.subr.mxu0 0.0
        %568 = vmatpush1.msra.mxu0 0.0
        %569 = vmatprep.subr.mxu0 0.0
        %570 = vmatpush1.msra.mxu0 0.0
        %571 = vmatprep.subr.mxu0 0.0
        %572 = vmatpush1.msra.mxu0 0.0
        %573 = vmatprep.subr.mxu0 0.0
        %574 = vmatpush1.msra.mxu0 0.0
        %575 = vmatprep.subr.mxu0 0.0
        %576 = vmatpush1.msra.mxu0 0.0
        %577 = vmatprep.subr.mxu0 0.0
        %578 = vmatpush1.msra.mxu0 0.0
        %579 = vmatprep.subr.mxu0 0.0
        %580 = vmatpush1.msra.mxu0 0.0
        %581 = vmatprep.subr.mxu0 0.0
        %582 = vmatpush1.msra.mxu0 0.0
        %583 = vmatprep.subr.mxu0 0.0
        %584 = vmatpush1.msra.mxu0 0.0
        %585 = vmatprep.mubr.f32.mxu0 0.0
        %586 = vmatmul.mubr.f32.gmra.mrb[0].mxu0 %v519
        %v587 = vpop.f32.mrb[0].mxu0
        %v588 = vadd.f32 %v515, %v587
        %v589 = vpop.f32.mrb[0].mxu0
        %590 = vdwg.mxu0
        %v591 = vmul.f32 %v588, 0.35355338
        %593 = vrot.lane.b32.xlu0 %v588, 120
        %v594 = vpop.permute.xlu0 %593
        %vm595 = vcmask 64512
        %v597 = vsel %vm595, %v591, 0
        %v599 = vsel %vm595, %v594, 0
        %601 = vmatprep.subr.mxu0 0.0
        %602 = vmatpush1.xpose.msra.mxu0 %v599
        %603 = vmatprep.subr.mxu0 0.0
        %604 = vmatpush1.xpose.msra.mxu0 0.0
        %605 = vmatprep.subr.mxu0 0.0
        %606 = vmatpush1.xpose.msra.mxu0 0.0
        %607 = vmatprep.subr.mxu0 0.0
        %608 = vmatpush1.xpose.msra.mxu0 0.0
        %609 = vmatprep.subr.mxu0 0.0
        %610 = vmatpush1.xpose.msra.mxu0 0.0
        %611 = vmatprep.subr.mxu0 0.0
        %612 = vmatpush1.xpose.msra.mxu0 0.0
        %613 = vmatprep.subr.mxu0 0.0
        %614 = vmatpush1.xpose.msra.mxu0 0.0
        %615 = vmatprep.subr.mxu0 0.0
        %616 = vmatpush1.xpose.msra.mxu0 0.0
        %617 = vmatprep.subr.mxu0 0.0
        %618 = vmatpush1.xpose.msra.mxu0 0.0
        %619 = vmatprep.subr.mxu0 0.0
        %620 = vmatpush1.xpose.msra.mxu0 0.0
        %621 = vmatprep.subr.mxu0 0.0
        %622 = vmatpush1.xpose.msra.mxu0 0.0
        %623 = vmatprep.subr.mxu0 0.0
        %624 = vmatpush1.xpose.msra.mxu0 0.0
        %625 = vmatprep.subr.mxu0 0.0
        %626 = vmatpush1.xpose.msra.mxu0 0.0
        %627 = vmatprep.subr.mxu0 0.0
        %628 = vmatpush1.xpose.msra.mxu0 0.0
        %629 = vmatprep.subr.mxu0 0.0
        %630 = vmatpush1.xpose.msra.mxu0 0.0
        %631 = vmatprep.subr.mxu0 0.0
        %632 = vmatpush1.xpose.msra.mxu0 0.0
        %633 = vmatprep.subr.mxu0 0.0
        %634 = vmatpush1.xpose.msra.mxu0 0.0
        %635 = vmatprep.subr.mxu0 0.0
        %636 = vmatpush1.xpose.msra.mxu0 0.0
        %637 = vmatprep.subr.mxu0 0.0
        %638 = vmatpush1.xpose.msra.mxu0 0.0
        %639 = vmatprep.subr.mxu0 0.0
        %640 = vmatpush1.xpose.msra.mxu0 0.0
        %641 = vmatprep.subr.mxu0 0.0
        %642 = vmatpush1.xpose.msra.mxu0 0.0
        %643 = vmatprep.subr.mxu0 0.0
        %644 = vmatpush1.xpose.msra.mxu0 0.0
        %645 = vmatprep.subr.mxu0 0.0
        %646 = vmatpush1.xpose.msra.mxu0 0.0
        %647 = vmatprep.subr.mxu0 0.0
        %648 = vmatpush1.xpose.msra.mxu0 0.0
        %649 = vmatprep.subr.mxu0 0.0
        %650 = vmatpush1.xpose.msra.mxu0 0.0
        %651 = vmatprep.subr.mxu0 0.0
        %652 = vmatpush1.xpose.msra.mxu0 0.0
        %653 = vmatprep.subr.mxu0 0.0
        %654 = vmatpush1.xpose.msra.mxu0 0.0
        %655 = vmatprep.subr.mxu0 0.0
        %656 = vmatpush1.xpose.msra.mxu0 0.0
        %657 = vmatprep.subr.mxu0 0.0
        %658 = vmatpush1.xpose.msra.mxu0 0.0
        %659 = vmatprep.subr.mxu0 0.0
        %660 = vmatpush1.xpose.msra.mxu0 0.0
        %661 = vmatprep.subr.mxu0 0.0
        %662 = vmatpush1.xpose.msra.mxu0 0.0
        %663 = vmatprep.subr.mxu0 0.0
        %664 = vmatpush1.xpose.msra.mxu0 0.0
        %665 = vmatprep.mubr.f32.mxu0 0.0
        %666 = vmatmul.mubr.f32.gmra.mrb[0].mxu0 %v597
        %v667 = vpop.f32.mrb[0].mxu0
        %v668 = vadd.f32 0.0, %v667
        %v669 = vpop.f32.mrb[0].mxu0
        %670 = vdwg.mxu0
        %v671 = vsel %vm595, %v668, -inf
        %672 = vmax.xlane.f32.xlu0 %v671
        %v673 = vpop.xlane.xlu0 %672
        %v674 = vsub.f32 %v668, %v673
        %v675 = vmul.f32 %v674, 1.442695
        %v676 = vpow.pop %v675
        %v677 = vsel %vm595, %v676, 0.0
        %678 = vadd.xlane.f32.xlu0 %v677
        %v679 = vpop.xlane.xlu0 %678
        %v680 = vrcp.pop %v679
        %v681 = vmul.f32 %v676, %v680
        %682 = vrot.lane.b32.xlu0 %v588, 112
        %v683 = vpop.permute.xlu0 %682
        %v686 = vsel %vm595, %v681, 0
        %688 = vmatprep.subr.mxu0 0.0
        %689 = vmatpush1.msra.mxu0 %v683
        %690 = vmatprep.subr.mxu0 0.0
        %691 = vmatpush1.msra.mxu0 0.0
        %692 = vmatprep.subr.mxu0 0.0
        %693 = vmatpush1.msra.mxu0 0.0
        %694 = vmatprep.subr.mxu0 0.0
        %695 = vmatpush1.msra.mxu0 0.0
        %696 = vmatprep.subr.mxu0 0.0
        %697 = vmatpush1.msra.mxu0 0.0
        %698 = vmatprep.subr.mxu0 0.0
        %699 = vmatpush1.msra.mxu0 0.0
        %700 = vmatprep.subr.mxu0 0.0
        %701 = vmatpush1.msra.mxu0 0.0
        %702 = vmatprep.subr.mxu0 0.0
        %703 = vmatpush1.msra.mxu0 0.0
        %704 = vmatprep.subr.mxu0 0.0
        %705 = vmatpush1.msra.mxu0 0.0
        %706 = vmatprep.subr.mxu0 0.0
        %707 = vmatpush1.msra.mxu0 0.0
        %708 = vmatprep.subr.mxu0 0.0
        %709 = vmatpush1.msra.mxu0 0.0
        %710 = vmatprep.subr.mxu0 0.0
        %711 = vmatpush1.msra.mxu0 0.0
        %712 = vmatprep.subr.mxu0 0.0
        %713 = vmatpush1.msra.mxu0 0.0
        %714 = vmatprep.subr.mxu0 0.0
        %715 = vmatpush1.msra.mxu0 0.0
        %716 = vmatprep.subr.mxu0 0.0
        %717 = vmatpush1.msra.mxu0 0.0
        %718 = vmatprep.subr.mxu0 0.0
        %719 = vmatpush1.msra.mxu0 0.0
        %720 = vmatprep.subr.mxu0 0.0
        %721 = vmatpush1.msra.mxu0 0.0
        %722 = vmatprep.subr.mxu0 0.0
        %723 = vmatpush1.msra.mxu0 0.0
        %724 = vmatprep.subr.mxu0 0.0
        %725 = vmatpush1.msra.mxu0 0.0
        %726 = vmatprep.subr.mxu0 0.0
        %727 = vmatpush1.msra.mxu0 0.0
        %728 = vmatprep.subr.mxu0 0.0
        %729 = vmatpush1.msra.mxu0 0.0
        %730 = vmatprep.subr.mxu0 0.0
        %731 = vmatpush1.msra.mxu0 0.0
        %732 = vmatprep.subr.mxu0 0.0
        %733 = vmatpush1.msra.mxu0 0.0
        %734 = vmatprep.subr.mxu0 0.0
        %735 = vmatpush1.msra.mxu0 0.0
        %736 = vmatprep.subr.mxu0 0.0
        %737 = vmatpush1.msra.mxu0 0.0
        %738 = vmatprep.subr.mxu0 0.0
        %739 = vmatpush1.msra.mxu0 0.0
        %740 = vmatprep.subr.mxu0 0.0
        %741 = vmatpush1.msra.mxu0 0.0
        %742 = vmatprep.subr.mxu0 0.0
        %743 = vmatpush1.msra.mxu0 0.0
        %744 = vmatprep.subr.mxu0 0.0
        %745 = vmatpush1.msra.mxu0 0.0
        %746 = vmatprep.subr.mxu0 0.0
        %747 = vmatpush1.msra.mxu0 0.0
        %748 = vmatprep.subr.mxu0 0.0
        %749 = vmatpush1.msra.mxu0 0.0
        %750 = vmatprep.subr.mxu0 0.0
        %751 = vmatpush1.msra.mxu0 0.0
        %752 = vmatprep.mubr.f32.mxu0 0.0
        %753 = vmatmul.mubr.f32.gmra.mrb[0].mxu0 %v686
        %v754 = vpop.f32.mrb[0].mxu0
        %v755 = vadd.f32 0.0, %v754
        %v756 = vpop.f32.mrb[0].mxu0
        %757 = vdwg.mxu0
        %v758 = vld [vmem:[#allocation2] sm:$0xff]
        %v759 = vld [vmem:[%s498] sm:$0xff]
        %v761 = vsel %vm595, %v755, 0
        %763 = vmatprep.subr.mxu0 0.0
        %764 = vmatpush1.msra.mxu0 %v759
        %765 = vmatprep.subr.mxu0 0.0
        %766 = vmatpush1.msra.mxu0 0.0
        %767 = vmatprep.subr.mxu0 0.0
        %768 = vmatpush1.msra.mxu0 0.0
        %769 = vmatprep.subr.mxu0 0.0
        %770 = vmatpush1.msra.mxu0 0.0
        %771 = vmatprep.subr.mxu0 0.0
        %772 = vmatpush1.msra.mxu0 0.0
        %773 = vmatprep.subr.mxu0 0.0
        %774 = vmatpush1.msra.mxu0 0.0
        %775 = vmatprep.subr.mxu0 0.0
        %776 = vmatpush1.msra.mxu0 0.0
        %777 = vmatprep.subr.mxu0 0.0
        %778 = vmatpush1.msra.mxu0 0.0
        %779 = vmatprep.subr.mxu0 0.0
        %780 = vmatpush1.msra.mxu0 0.0
        %781 = vmatprep.subr.mxu0 0.0
        %782 = vmatpush1.msra.mxu0 0.0
        %783 = vmatprep.subr.mxu0 0.0
        %784 = vmatpush1.msra.mxu0 0.0
        %785 = vmatprep.subr.mxu0 0.0
        %786 = vmatpush1.msra.mxu0 0.0
        %787 = vmatprep.subr.mxu0 0.0
        %788 = vmatpush1.msra.mxu0 0.0
        %789 = vmatprep.subr.mxu0 0.0
        %790 = vmatpush1.msra.mxu0 0.0
        %791 = vmatprep.subr.mxu0 0.0
        %792 = vmatpush1.msra.mxu0 0.0
        %793 = vmatprep.subr.mxu0 0.0
        %794 = vmatpush1.msra.mxu0 0.0
        %795 = vmatprep.subr.mxu0 0.0
        %796 = vmatpush1.msra.mxu0 0.0
        %797 = vmatprep.subr.mxu0 0.0
        %798 = vmatpush1.msra.mxu0 0.0
        %799 = vmatprep.subr.mxu0 0.0
        %800 = vmatpush1.msra.mxu0 0.0
        %801 = vmatprep.subr.mxu0 0.0
        %802 = vmatpush1.msra.mxu0 0.0
        %803 = vmatprep.subr.mxu0 0.0
        %804 = vmatpush1.msra.mxu0 0.0
        %805 = vmatprep.subr.mxu0 0.0
        %806 = vmatpush1.msra.mxu0 0.0
        %807 = vmatprep.subr.mxu0 0.0
        %808 = vmatpush1.msra.mxu0 0.0
        %809 = vmatprep.subr.mxu0 0.0
        %810 = vmatpush1.msra.mxu0 0.0
        %811 = vmatprep.subr.mxu0 0.0
        %812 = vmatpush1.msra.mxu0 0.0
        %813 = vmatprep.subr.mxu0 0.0
        %814 = vmatpush1.msra.mxu0 0.0
        %815 = vmatprep.subr.mxu0 0.0
        %816 = vmatpush1.msra.mxu0 0.0
        %817 = vmatprep.subr.mxu0 0.0
        %818 = vmatpush1.msra.mxu0 0.0
        %819 = vmatprep.subr.mxu0 0.0
        %820 = vmatpush1.msra.mxu0 0.0
        %821 = vmatprep.subr.mxu0 0.0
        %822 = vmatpush1.msra.mxu0 0.0
        %823 = vmatprep.subr.mxu0 0.0
        %824 = vmatpush1.msra.mxu0 0.0
        %825 = vmatprep.subr.mxu0 0.0
        %826 = vmatpush1.msra.mxu0 0.0
        %827 = vmatprep.mubr.f32.mxu0 0.0
        %828 = vmatmul.mubr.f32.gmra.mrb[0].mxu0 %v761
        %v829 = vpop.f32.mrb[0].mxu0
        %v830 = vadd.f32 0.0, %v829
        %v831 = vpop.f32.mrb[0].mxu0
        %832 = vdwg.mxu0
        %v833 = vadd.f32 %v758, %v830
        %834 = vst.msk [vmem:[#allocation2] sm:$0xff] %vm517, %v833
        %p835 = scmp.eq.s32.totalorder %s32, 3
        // Predicated region
        $region77: #{tpu_custom_call.1} parent=71 // pred_check
          %p836 = pneg %p835
        $region78: #{tpu_custom_call.1} parent=71 // pred_check_branch
          %838 = sbr.rel (%p836) target = $region80
        $region79: #{tpu_custom_call.1} parent=71 // pred_region
          %v839 = vld [vmem:[#allocation2] sm:$0xff]
          %v840 = vld [vmem:[%s4] sm:$0x1]
          %v842 = vlaneseq
          %v843 = vshrl.u32 %v842, 7
          %v844 = vsub.s32 0, %v843
          %v845 = vrot.slane %v840, %v844
          %v847 = vadd.f32 %v839, %v845
          %v848 = vadd.f32 %v499, %v847
          %v849 = vld [vmem:[%s5] sm:$0x1]
          %v850 = vld [vmem:[%s6] sm:$0x1]
          %v851 = vsel %vm517, %v848, 0.0
          %852 = vadd.xlane.f32.xlu0 %v851
          %v853 = vpop.xlane.xlu0 %852
          %v854 = vrcp.pop 32.0
          %v855 = vmul.f32 %v853, %v854
          %v856 = vsub.f32 %v848, %v855
          %v857 = vmul.f32 %v856, %v856
          %v858 = vsel %vm517, %v857, 0.0
          %859 = vadd.xlane.f32.xlu0 %v858
          %v860 = vpop.xlane.xlu0 %859
          %v861 = vmul.f32 %v860, %v854
          %v862 = vadd.f32 %v861, 1e-05
          %v863 = vrsqrt.pop %v862
          %v864 = vmul.f32 %v856, %v863
          %v866 = vlaneseq
          %v867 = vshrl.u32 %v866, 7
          %v868 = vsub.s32 0, %v867
          %v869 = vrot.slane %v849, %v868
          %v871 = vmul.f32 %v864, %v869
          %v873 = vlaneseq
          %v874 = vshrl.u32 %v873, 7
          %v875 = vsub.s32 0, %v874
          %v876 = vrot.slane %v850, %v875
          %v878 = vadd.f32 %v871, %v876
          %v879 = vld [vmem:[%s7] sm:$0xff]
          %v880 = vld [vmem:[%s7 + $0x8] sm:$0xff]
          %v881 = vld [vmem:[%s7 + $0x10] sm:$0xff]
          %v882 = vld [vmem:[%s7 + $0x18] sm:$0xff]
          %v883 = vld [vmem:[%s8] sm:$0x1]
          %v885 = vlaneseq
          %v886 = vshrl.u32 %v885, 7
          %v887 = vsub.s32 0, %v886
          %v888 = vrot.slane %v883, %v887
          %v891 = vsel %vm517, %v878, 0
          %893 = vmatprep.subr.mxu0 0.0
          %894 = vmatpush1.msra.mxu0 %v879
          %895 = vmatprep.subr.mxu0 0.0
          %896 = vmatpush1.msra.mxu0 %v880
          %897 = vmatprep.subr.mxu0 0.0
          %898 = vmatpush1.msra.mxu0 %v881
          %899 = vmatprep.subr.mxu0 0.0
          %900 = vmatpush1.msra.mxu0 %v882
          %901 = vmatprep.subr.mxu0 0.0
          %902 = vmatpush1.msra.mxu0 0.0
          %903 = vmatprep.subr.mxu0 0.0
          %904 = vmatpush1.msra.mxu0 0.0
          %905 = vmatprep.subr.mxu0 0.0
          %906 = vmatpush1.msra.mxu0 0.0
          %907 = vmatprep.subr.mxu0 0.0
          %908 = vmatpush1.msra.mxu0 0.0
          %909 = vmatprep.subr.mxu0 0.0
          %910 = vmatpush1.msra.mxu0 0.0
          %911 = vmatprep.subr.mxu0 0.0
          %912 = vmatpush1.msra.mxu0 0.0
          %913 = vmatprep.subr.mxu0 0.0
          %914 = vmatpush1.msra.mxu0 0.0
          %915 = vmatprep.subr.mxu0 0.0
          %916 = vmatpush1.msra.mxu0 0.0
          %917 = vmatprep.subr.mxu0 0.0
          %918 = vmatpush1.msra.mxu0 0.0
          %919 = vmatprep.subr.mxu0 0.0
          %920 = vmatpush1.msra.mxu0 0.0
          %921 = vmatprep.subr.mxu0 0.0
          %922 = vmatpush1.msra.mxu0 0.0
          %923 = vmatprep.subr.mxu0 0.0
          %924 = vmatpush1.msra.mxu0 0.0
          %925 = vmatprep.subr.mxu0 0.0
          %926 = vmatpush1.msra.mxu0 0.0
          %927 = vmatprep.subr.mxu0 0.0
          %928 = vmatpush1.msra.mxu0 0.0
          %929 = vmatprep.subr.mxu0 0.0
          %930 = vmatpush1.msra.mxu0 0.0
          %931 = vmatprep.subr.mxu0 0.0
          %932 = vmatpush1.msra.mxu0 0.0
          %933 = vmatprep.subr.mxu0 0.0
          %934 = vmatpush1.msra.mxu0 0.0
          %935 = vmatprep.subr.mxu0 0.0
          %936 = vmatpush1.msra.mxu0 0.0
          %937 = vmatprep.subr.mxu0 0.0
          %938 = vmatpush1.msra.mxu0 0.0
          %939 = vmatprep.subr.mxu0 0.0
          %940 = vmatpush1.msra.mxu0 0.0
          %941 = vmatprep.subr.mxu0 0.0
          %942 = vmatpush1.msra.mxu0 0.0
          %943 = vmatprep.subr.mxu0 0.0
          %944 = vmatpush1.msra.mxu0 0.0
          %945 = vmatprep.subr.mxu0 0.0
          %946 = vmatpush1.msra.mxu0 0.0
          %947 = vmatprep.subr.mxu0 0.0
          %948 = vmatpush1.msra.mxu0 0.0
          %949 = vmatprep.subr.mxu0 0.0
          %950 = vmatpush1.msra.mxu0 0.0
          %951 = vmatprep.subr.mxu0 0.0
          %952 = vmatpush1.msra.mxu0 0.0
          %953 = vmatprep.subr.mxu0 0.0
          %954 = vmatpush1.msra.mxu0 0.0
          %955 = vmatprep.subr.mxu0 0.0
          %956 = vmatpush1.msra.mxu0 0.0
          %957 = vmatprep.mubr.f32.mxu0 0.0
          %958 = vmatmul.mubr.f32.gmra.mrb[0].mxu0 %v891
          %v959 = vpop.f32.mrb[0].mxu0
          %v960 = vadd.f32 %v888, %v959
          %v961 = vpop.f32.mrb[0].mxu0
          %962 = vdwg.mxu0
          %v963 = vmax.f32 %v960, 0.0
          %v964 = vld [vmem:[%s9] sm:$0xff]
          %v965 = vld [vmem:[%s9 + $0x8] sm:$0xff]
          %v966 = vld [vmem:[%s9 + $0x10] sm:$0xff]
          %v967 = vld [vmem:[%s9 + $0x18] sm:$0xff]
          %v968 = vld [vmem:[%s9 + $0x20] sm:$0xff]
          %v969 = vld [vmem:[%s9 + $0x28] sm:$0xff]
          %v970 = vld [vmem:[%s9 + $0x30] sm:$0xff]
          %v971 = vld [vmem:[%s9 + $0x38] sm:$0xff]
          %v972 = vld [vmem:[%s10] sm:$0x1]
          %v974 = vlaneseq
          %v975 = vshrl.u32 %v974, 7
          %v976 = vsub.s32 0, %v975
          %v977 = vrot.slane %v972, %v976
          %vm979 = vcmask 523264
          %v981 = vsel %vm979, %v963, 0
          %983 = vmatprep.subr.mxu0 0.0
          %984 = vmatpush1.msra.mxu0 %v964
          %985 = vmatprep.subr.mxu0 0.0
          %986 = vmatpush1.msra.mxu0 %v965
          %987 = vmatprep.subr.mxu0 0.0
          %988 = vmatpush1.msra.mxu0 %v966
          %989 = vmatprep.subr.mxu0 0.0
          %990 = vmatpush1.msra.mxu0 %v967
          %991 = vmatprep.subr.mxu0 0.0
          %992 = vmatpush1.msra.mxu0 %v968
          %993 = vmatprep.subr.mxu0 0.0
          %994 = vmatpush1.msra.mxu0 %v969
          %995 = vmatprep.subr.mxu0 0.0
          %996 = vmatpush1.msra.mxu0 %v970
          %997 = vmatprep.subr.mxu0 0.0
          %998 = vmatpush1.msra.mxu0 %v971
          %999 = vmatprep.subr.mxu0 0.0
          %1000 = vmatpush1.msra.mxu0 0.0
          %1001 = vmatprep.subr.mxu0 0.0
          %1002 = vmatpush1.msra.mxu0 0.0
          %1003 = vmatprep.subr.mxu0 0.0
          %1004 = vmatpush1.msra.mxu0 0.0
          %1005 = vmatprep.subr.mxu0 0.0
          %1006 = vmatpush1.msra.mxu0 0.0
          %1007 = vmatprep.subr.mxu0 0.0
          %1008 = vmatpush1.msra.mxu0 0.0
          %1009 = vmatprep.subr.mxu0 0.0
          %1010 = vmatpush1.msra.mxu0 0.0
          %1011 = vmatprep.subr.mxu0 0.0
          %1012 = vmatpush1.msra.mxu0 0.0
          %1013 = vmatprep.subr.mxu0 0.0
          %1014 = vmatpush1.msra.mxu0 0.0
          %1015 = vmatprep.subr.mxu0 0.0
          %1016 = vmatpush1.msra.mxu0 0.0
          %1017 = vmatprep.subr.mxu0 0.0
          %1018 = vmatpush1.msra.mxu0 0.0
          %1019 = vmatprep.subr.mxu0 0.0
          %1020 = vmatpush1.msra.mxu0 0.0
          %1021 = vmatprep.subr.mxu0 0.0
          %1022 = vmatpush1.msra.mxu0 0.0
          %1023 = vmatprep.subr.mxu0 0.0
          %1024 = vmatpush1.msra.mxu0 0.0
          %1025 = vmatprep.subr.mxu0 0.0
          %1026 = vmatpush1.msra.mxu0 0.0
          %1027 = vmatprep.subr.mxu0 0.0
          %1028 = vmatpush1.msra.mxu0 0.0
          %1029 = vmatprep.subr.mxu0 0.0
          %1030 = vmatpush1.msra.mxu0 0.0
          %1031 = vmatprep.subr.mxu0 0.0
          %1032 = vmatpush1.msra.mxu0 0.0
          %1033 = vmatprep.subr.mxu0 0.0
          %1034 = vmatpush1.msra.mxu0 0.0
          %1035 = vmatprep.subr.mxu0 0.0
          %1036 = vmatpush1.msra.mxu0 0.0
          %1037 = vmatprep.subr.mxu0 0.0
          %1038 = vmatpush1.msra.mxu0 0.0
          %1039 = vmatprep.subr.mxu0 0.0
          %1040 = vmatpush1.msra.mxu0 0.0
          %1041 = vmatprep.subr.mxu0 0.0
          %1042 = vmatpush1.msra.mxu0 0.0
          %1043 = vmatprep.subr.mxu0 0.0
          %1044 = vmatpush1.msra.mxu0 0.0
          %1045 = vmatprep.subr.mxu0 0.0
          %1046 = vmatpush1.msra.mxu0 0.0
          %1047 = vmatprep.mubr.f32.mxu0 0.0
          %1048 = vmatmul.mubr.f32.gmra.mrb[0].mxu0 %v981
          %v1049 = vpop.f32.mrb[0].mxu0
          %v1050 = vadd.f32 %v977, %v1049
          %v1051 = vpop.f32.mrb[0].mxu0
          %1052 = vdwg.mxu0
          %v1053 = vadd.f32 %v878, %v1050
          %v1054 = vld [vmem:[%s11] sm:$0x1]
          %v1055 = vld [vmem:[%s12] sm:$0x1]
          %v1056 = vsel %vm517, %v1053, 0.0
          %1057 = vadd.xlane.f32.xlu0 %v1056
          %v1058 = vpop.xlane.xlu0 %1057
          %v1059 = vmul.f32 %v1058, %v854
          %v1060 = vsub.f32 %v1053, %v1059
          %v1061 = vmul.f32 %v1060, %v1060
          %v1062 = vsel %vm517, %v1061, 0.0
          %1063 = vadd.xlane.f32.xlu0 %v1062
          %v1064 = vpop.xlane.xlu0 %1063
          %v1065 = vmul.f32 %v1064, %v854
          %v1066 = vadd.f32 %v1065, 1e-05
          %v1067 = vrsqrt.pop %v1066
          %v1068 = vmul.f32 %v1060, %v1067
          %v1070 = vlaneseq
          %v1071 = vshrl.u32 %v1070, 7
          %v1072 = vsub.s32 0, %v1071
          %v1073 = vrot.slane %v1054, %v1072
          %v1075 = vmul.f32 %v1068, %v1073
          %v1077 = vlaneseq
          %v1078 = vshrl.u32 %v1077, 7
          %v1079 = vsub.s32 0, %v1078
          %v1080 = vrot.slane %v1055, %v1079
          %v1082 = vadd.f32 %v1075, %v1080
          %1083 = vst.msk [vmem:[%s482] sm:$0xff] %vm517, %v1082
        $region80: #{tpu_custom_call.1} parent=71 // pred_fallthru
          _
        %s1084 = sand.u32 %s340, 1
        %s1085 = scalar_lea.sflag [#allocation4], %s1084
        %s1086 = sand.u32 %s340, 1
        %s1087 = smul.addr %s1086, 8
        %s1088 = scalar_lea.vmem [#allocation3], %s1087
        // Predicated region
        $region81: #{tpu_custom_call.1} parent=71 // pred_check
          %p1089 = pneg %p350
        $region82: #{tpu_custom_call.1} parent=71 // pred_check_branch
          %1091 = sbr.rel (%p1089) target = $region84
        $region83: #{tpu_custom_call.1} parent=71 // pred_region
          %s1093 = ssub.s32 128, 128
          %1094 = vsyncadd %s1085, %s1093
          %s1095 = smul.addr %s31, 128
          %s1096 = scalar_lea.hbm %s13, %s1095
          %s1098 = sshll.u32 %s1088, 4
          %s1099 = int_to_ptr.vmem [resolvable:$true] %s1098
          %1101 = dma.vmem_to_hbm [thread:$0]  %s1099, 128, %s1096, %s1085
        $region84: #{tpu_custom_call.1} parent=71 // pred_fallthru
          _
      $region72: #{tpu_custom_call.1} parent=5 // pred_fallthru
        _
      %p1102 = scmp.le.s32.totalorder 2, %s22
      // Predicated region
      $region85: #{tpu_custom_call.1} parent=5 // pred_check
        %p1103 = pneg %p1102
      $region86: #{tpu_custom_call.1} parent=5 // pred_check_branch
        %1105 = sbr.rel (%p1103) target = $region88
      $region87: #{tpu_custom_call.1} parent=5 // pred_region
        %s1106 = ssub.s32 %s22, 2
        // Predicated region
        $region89: #{tpu_custom_call.1} parent=87 // pred_check
          %p1107 = pneg %p356
        $region90: #{tpu_custom_call.1} parent=87 // pred_check_branch
          %1109 = sbr.rel (%p1107) target = $region92
        $region91: #{tpu_custom_call.1} parent=87 // pred_region
          %s1110 = sand.u32 %s341, 1
          %s1111 = scalar_lea.sflag [#allocation4], %s1110
          %s1112 = sand.u32 %s341, 1
          %s1113 = smul.addr %s1112, 8
          %s1114 = scalar_lea.vmem [#allocation3], %s1113
          %1115 = dma.done %s1111, 128
        $region92: #{tpu_custom_call.1} parent=87 // pred_fallthru
          _
      $region88: #{tpu_custom_call.1} parent=5 // pred_fallthru
        _
    $region6: #{tpu_custom_call.1} parent=1 // loop_footer
      %s26 = sadd.s32 1, %s22
    $region7: #{tpu_custom_call.1} parent=1 // loop_footer_branch
      %21 = sbr.rel target = $region3
    $region8: #{tpu_custom_call.1} parent=1 // loop_exit
      _
    %1116 = vsyncpa [#allocation4], 1
    %s1117 = scalar_lea.sflag [#allocation4], 1
    %1118 = vsyncpa %s1117, 1

</llo_original>
